<compile_context>
chip_gen: v7x
topology: tpu7x:2x2x1
jax: 0.10.0
libtpu: 0.0.40
codegen_flags: <defaults>
</compile_context>

<pallas_src>
import functools
import math

import jax
import jax.numpy as jnp
from jax.experimental import pallas as pl
from jax.experimental.pallas import tpu as pltpu

# Squeeze marker for size-1 batch dims in BlockSpecs (None is the legacy spelling).
_SQUEEZE = pl.Squeezed() if hasattr(pl, "Squeezed") else None

_VMEM_LIMIT = 64 * 1024 * 1024  # explicit scoped-VMEM limit (<= physical on v5e/v6e/v7x)


def _pick_tile(n, target):
    """Largest tile <= target that divides n and is a multiple of 8 (or n itself)."""
    if n <= target:
        return n
    t = (target // 8) * 8
    while t >= 8:
        if n % t == 0:
            return t
        t -= 8
    return n


# --------------------------------------------------------------------------------------
# Kernel 1: QKV projection.  x-tile (ts, D) @ per-head weights (D, dh) -> (B, H, S, dh).
# --------------------------------------------------------------------------------------
def _qkv_proj_kernel(x_ref, wq_ref, wk_ref, wv_ref, bq_ref, bk_ref, bv_ref,
                     q_ref, k_ref, v_ref, *, n_heads):
    x = x_ref[...]                                            # (ts, D)
    for h in range(n_heads):                                  # static unroll; no lane slicing
        q_ref[h] = (jnp.dot(x, wq_ref[h], preferred_element_type=jnp.float32)
                    + bq_ref[h]).astype(q_ref.dtype)          # scale already folded into wq/bq
        k_ref[h] = (jnp.dot(x, wk_ref[h], preferred_element_type=jnp.float32)
                    + bk_ref[h]).astype(k_ref.dtype)
        v_ref[h] = (jnp.dot(x, wv_ref[h], preferred_element_type=jnp.float32)
                    + bv_ref[h]).astype(v_ref.dtype)


# --------------------------------------------------------------------------------------
# Kernel 2: flash attention (online softmax, heads batched) + fused out_proj.
# --------------------------------------------------------------------------------------
def _flash_attn_out_proj_kernel(q_ref, k_ref, v_ref, wo_ref, bo_ref, o_ref,
                                m_sc, l_sc, acc_sc, *, n_heads, tq, tk, causal):
    qi = pl.program_id(1)
    ki = pl.program_id(2)

    @pl.when(ki == 0)
    def _init():
        m_sc[...] = jnp.full(m_sc.shape, -jnp.inf, m_sc.dtype)
        l_sc[...] = jnp.zeros(l_sc.shape, l_sc.dtype)
        acc_sc[...] = jnp.zeros(acc_sc.shape, acc_sc.dtype)

    def _update():
        q = q_ref[...]                                        # (H, tq, dh), pre-scaled by 1/sqrt(dh)
        k = k_ref[...]                                        # (H, tk, dh)
        # Heads batched in one dot_general -> better MXU packing than per-head dots.
        s = jnp.einsum("hqd,hkd->hqk", q, k, preferred_element_type=jnp.float32)
        if causal:
            rows = qi * tq + jax.lax.broadcasted_iota(jnp.int32, s.shape, 1)
            cols = ki * tk + jax.lax.broadcasted_iota(jnp.int32, s.shape, 2)
            # Strict upper triangle masked, matching torch masked_fill_(-inf) then /= sqrt.
            s = jnp.where(cols - rows >= 1, -jnp.inf, s)
        m_prev = m_sc[...]
        m_new = jnp.maximum(m_prev, jnp.max(s, axis=-1, keepdims=True))
        alpha = jnp.exp(m_prev - m_new)
        p = jnp.exp(s - m_new)
        l_sc[...] = alpha * l_sc[...] + jnp.sum(p, axis=-1, keepdims=True)
        acc_sc[...] = alpha * acc_sc[...] + jnp.einsum(
            "hqk,hkd->hqd", p.astype(v_ref.dtype), v_ref[...],
            preferred_element_type=jnp.float32)
        m_sc[...] = m_new

    if causal:
        # Skip kv tiles that are entirely above the diagonal (fully masked).
        pl.when(ki * tk <= qi * tq + (tq - 1))(_update)
    else:
        _update()

    @pl.when(ki == pl.num_programs(2) - 1)
    def _finalize():
        # Normalize (approx reciprocal runs on the EUP slot) and fuse the out_proj:
        # y = sum_h attn_h @ W_out_h + b_out  -> no head concat along the lane axis.
        attn = (acc_sc[...] * pl.reciprocal(l_sc[...], approx=True)).astype(wo_ref.dtype)
        y = jnp.dot(attn[0], wo_ref[0], preferred_element_type=jnp.float32)
        for h in range(1, n_heads):
            y = y + jnp.dot(attn[h], wo_ref[h], preferred_element_type=jnp.float32)
        o_ref[...] = (y + bo_ref[...]).astype(o_ref.dtype)


# --------------------------------------------------------------------------------------
# Wrapper
# --------------------------------------------------------------------------------------
def self_attention(x, w_in, b_in, w_out, b_out, *, n_heads, causal_mask=False,
                   q_tile=None, kv_tile=None, proj_tile=None):
    """x: (B, S, D); w_in: (3D, D); b_in: (3D,); w_out: (D, D); b_out: (D,)."""
    B, S, D = x.shape
    assert D % n_heads == 0
    dh = D // n_heads
    inv_scale = 1.0 / math.sqrt(dh)
    dtype = x.dtype

    tq = q_tile or _pick_tile(S, 256)
    tk = kv_tile or _pick_tile(S, 256)
    ts = proj_tile or _pick_tile(S, 512)
    assert S % tq == 0 and S % tk == 0 and S % ts == 0

    # ---- glue: reorganize nn.Linear weights into per-head layouts (outside the kernels).
    # in_proj weight rows: [0:D]=q, [D:2D]=k, [2D:3D]=v; per head h the slab is (dh, D).
    wq = (jnp.transpose(w_in[:D].reshape(n_heads, dh, D), (0, 2, 1)) * inv_scale).astype(dtype)
    wk = jnp.transpose(w_in[D:2 * D].reshape(n_heads, dh, D), (0, 2, 1)).astype(dtype)
    wv = jnp.transpose(w_in[2 * D:].reshape(n_heads, dh, D), (0, 2, 1)).astype(dtype)
    bq = (b_in[:D] * inv_scale).reshape(n_heads, 1, dh).astype(dtype)
    bk = b_in[D:2 * D].reshape(n_heads, 1, dh).astype(dtype)
    bv = b_in[2 * D:].reshape(n_heads, 1, dh).astype(dtype)
    # out_proj: y = concat_h(attn_h) @ W_out^T + b_out == sum_h attn_h @ W_out^T[h*dh:(h+1)*dh]
    wo = jnp.transpose(w_out).reshape(n_heads, dh, D).astype(dtype)   # (H, dh, D)
    bo = b_out.reshape(1, D).astype(dtype)

    const3 = lambda b, s: (0, 0, 0)

    # ---- kernel 1: q, k, v in (B, H, S, dh)
    q, k, v = pl.pallas_call(
        functools.partial(_qkv_proj_kernel, n_heads=n_heads),
        out_shape=tuple(jax.ShapeDtypeStruct((B, n_heads, S, dh), dtype) for _ in range(3)),
        grid_spec=pltpu.PrefetchScalarGridSpec(
            num_scalar_prefetch=0,
            grid=(B, S // ts),
            in_specs=[
                pl.BlockSpec((_SQUEEZE, ts, D), lambda b, s: (b, s, 0)),
                pl.BlockSpec((n_heads, D, dh), const3),
                pl.BlockSpec((n_heads, D, dh), const3),
                pl.BlockSpec((n_heads, D, dh), const3),
                pl.BlockSpec((n_heads, 1, dh), const3),
                pl.BlockSpec((n_heads, 1, dh), const3),
                pl.BlockSpec((n_heads, 1, dh), const3),
            ],
            out_specs=[pl.BlockSpec((_SQUEEZE, n_heads, ts, dh),
                                    lambda b, s: (b, 0, s, 0))] * 3,
        ),
        compiler_params=pltpu.CompilerParams(
            dimension_semantics=("parallel", "parallel"),
            vmem_limit_bytes=_VMEM_LIMIT),
    )(x, wq, wk, wv, bq, bk, bv)

    # ---- kernel 2: flash attention + out_proj -> (B, S, D)
    y = pl.pallas_call(
        functools.partial(_flash_attn_out_proj_kernel, n_heads=n_heads,
                          tq=tq, tk=tk, causal=causal_mask),
        out_shape=jax.ShapeDtypeStruct((B, S, D), dtype),
        grid_spec=pltpu.PrefetchScalarGridSpec(
            num_scalar_prefetch=0,
            grid=(B, S // tq, S // tk),
            in_specs=[
                pl.BlockSpec((_SQUEEZE, n_heads, tq, dh), lambda b, qi, ki: (b, 0, qi, 0)),
                pl.BlockSpec((_SQUEEZE, n_heads, tk, dh), lambda b, qi, ki: (b, 0, ki, 0)),
                pl.BlockSpec((_SQUEEZE, n_heads, tk, dh), lambda b, qi, ki: (b, 0, ki, 0)),
                pl.BlockSpec((n_heads, dh, D), lambda b, qi, ki: (0, 0, 0)),
                pl.BlockSpec((1, D), lambda b, qi, ki: (0, 0)),
            ],
            out_specs=pl.BlockSpec((_SQUEEZE, tq, D), lambda b, qi, ki: (b, qi, 0)),
            scratch_shapes=[
                pltpu.VMEM((n_heads, tq, 1), jnp.float32),    # running max m
                pltpu.VMEM((n_heads, tq, 1), jnp.float32),    # running denom l
                pltpu.VMEM((n_heads, tq, dh), jnp.float32),   # running accumulator
            ],
        ),
        compiler_params=pltpu.CompilerParams(
            dimension_semantics=("parallel", "parallel", "arbitrary"),
            vmem_limit_bytes=_VMEM_LIMIT),
    )(q, k, v, wo, bo)
    return y


# --------------------------------------------------------------------------------------
# Pure-JAX reference mirroring the PyTorch forward exactly.
# --------------------------------------------------------------------------------------
def self_attention_ref(x, w_in, b_in, w_out, b_out, *, n_heads, causal_mask=False):
    B, S, D = x.shape
    d_head = D // n_heads
    qkv = jnp.einsum("bsd,ed->bse", x, w_in) + b_in
    q, k, v = jnp.split(qkv, 3, axis=-1)

    def to_heads(t):
        return jnp.transpose(t.reshape(B, S, n_heads, d_head), (0, 2, 1, 3))

    q, k, v = to_heads(q), to_heads(k), to_heads(v)
    weight = jnp.einsum("bhqd,bhkd->bhqk", q, k)
    if causal_mask:
        mask = (jnp.arange(S)[None, :] - jnp.arange(S)[:, None]) >= 1
        weight = jnp.where(mask[None, None], -jnp.inf, weight)
    weight = weight / math.sqrt(d_head)
    weight = jax.nn.softmax(weight, axis=-1)
    out = jnp.einsum("bhqk,bhkd->bhqd", weight, v)
    out = jnp.transpose(out, (0, 2, 1, 3)).reshape(B, S, D)
    return jnp.einsum("bsd,ed->bse", out, w_out) + b_out


if __name__ == "__main__":
    B, S, D, n_heads = 2, 8, 32, 4

    key = jax.random.PRNGKey(0)
    kx, kwi, kbi, kwo, kbo = jax.random.split(key, 5)
    x = jax.random.normal(kx, (B, S, D), dtype=jnp.float32)
    # nn.Linear(d_embed, 3*d_embed): weight (3D, D), bias (3D,)
    w_in = jax.random.normal(kwi, (3 * D, D), dtype=jnp.float32) * (1.0 / math.sqrt(D))
    b_in = jax.random.normal(kbi, (3 * D,), dtype=jnp.float32) * 0.1
    # nn.Linear(d_embed, d_embed): weight (D, D), bias (D,)
    w_out = jax.random.normal(kwo, (D, D), dtype=jnp.float32) * (1.0 / math.sqrt(D))
    b_out = jax.random.normal(kbo, (D,), dtype=jnp.float32) * 0.1

    for causal in (False, True):
        y = self_attention(x, w_in, b_in, w_out, b_out,
                           n_heads=n_heads, causal_mask=causal)
        y = jax.block_until_ready(y)
        y_ref = self_attention_ref(x, w_in, b_in, w_out, b_out,
                                   n_heads=n_heads, causal_mask=causal)
        err = float(jnp.max(jnp.abs(y - y_ref)))
        # Tolerance accounts for pl.reciprocal(approx=True) in the softmax
        # normalization; folded-scale / online-softmax rounding is ~1e-6.
        assert jnp.allclose(y, y_ref, atol=1e-2, rtol=1e-2), (
            f"mismatch (causal={causal}): max abs err {err}")

    print("KERNEL_OK")
</pallas_src>

<mosaic_0001>
module attributes {stable_mosaic.version = 11 : i64} {
  func.func @_qkv_proj_kernel(%arg0: i32, %arg1: i32, %arg2: memref<1x8x32xf32, #tpu.memory_space<vmem>>, %arg3: memref<4x32x8xf32, #tpu.memory_space<vmem>>, %arg4: memref<4x32x8xf32, #tpu.memory_space<vmem>>, %arg5: memref<4x32x8xf32, #tpu.memory_space<vmem>>, %arg6: memref<4x1x8xf32, #tpu.memory_space<vmem>>, %arg7: memref<4x1x8xf32, #tpu.memory_space<vmem>>, %arg8: memref<4x1x8xf32, #tpu.memory_space<vmem>>, %arg9: memref<1x4x8x8xf32, #tpu.memory_space<vmem>>, %arg10: memref<1x4x8x8xf32, #tpu.memory_space<vmem>>, %arg11: memref<1x4x8x8xf32, #tpu.memory_space<vmem>>) attributes {dimension_semantics = [#tpu.dimension_semantics<parallel>, #tpu.dimension_semantics<parallel>], iteration_bounds = array<i64: 2, 1>, scalar_prefetch = 0 : i64, scratch_operands = 0 : i64, tpu.core_type = #tpu.core_type<tc>, window_params = [{transform_indices = @transform_0, window_bounds = array<i64: 1, 8, 32>}, {pipeline_mode = #tpu.pipeline_mode<synchronous>, transform_indices = @transform_1, window_bounds = array<i64: 4, 32, 8>}, {pipeline_mode = #tpu.pipeline_mode<synchronous>, transform_indices = @transform_2, window_bounds = array<i64: 4, 32, 8>}, {pipeline_mode = #tpu.pipeline_mode<synchronous>, transform_indices = @transform_3, window_bounds = array<i64: 4, 32, 8>}, {pipeline_mode = #tpu.pipeline_mode<synchronous>, transform_indices = @transform_4, window_bounds = array<i64: 4, 1, 8>}, {pipeline_mode = #tpu.pipeline_mode<synchronous>, transform_indices = @transform_5, window_bounds = array<i64: 4, 1, 8>}, {pipeline_mode = #tpu.pipeline_mode<synchronous>, transform_indices = @transform_6, window_bounds = array<i64: 4, 1, 8>}, {transform_indices = @transform_7, window_bounds = array<i64: 1, 4, 8, 8>}, {transform_indices = @transform_8, window_bounds = array<i64: 1, 4, 8, 8>}, {transform_indices = @transform_9, window_bounds = array<i64: 1, 4, 8, 8>}]} {
    %c0 = arith.constant 0 : index
    %c0_0 = arith.constant 0 : index
    %c0_1 = arith.constant 0 : index
    %0 = vector.load %arg2[%c0, %c0_0, %c0_1] : memref<1x8x32xf32, #tpu.memory_space<vmem>>, vector<1x8x32xf32>
    %1 = vector.shape_cast %0 : vector<1x8x32xf32> to vector<8x32xf32>
    %c0_2 = arith.constant 0 : index
    %c0_3 = arith.constant 0 : index
    %c0_4 = arith.constant 0 : index
    %2 = vector.load %arg3[%c0_2, %c0_3, %c0_4] : memref<4x32x8xf32, #tpu.memory_space<vmem>>, vector<1x32x8xf32>
    %3 = vector.shape_cast %2 : vector<1x32x8xf32> to vector<32x8xf32>
    %cst = arith.constant dense<0.000000e+00> : vector<8x8xf32>
    %4 = tpu.matmul %1, %3, %cst {dimension_numbers = #tpu.dot_dimension_numbers<[1], [0], [0], [1], [0, 0, 1, 1], [], []>} : vector<8x32xf32>, vector<32x8xf32>, vector<8x8xf32> -> vector<8x8xf32>
    %c0_5 = arith.constant 0 : index
    %c0_6 = arith.constant 0 : index
    %c0_7 = arith.constant 0 : index
    %5 = vector.load %arg6[%c0_5, %c0_6, %c0_7] : memref<4x1x8xf32, #tpu.memory_space<vmem>>, vector<1x1x8xf32>
    %6 = vector.shape_cast %5 : vector<1x1x8xf32> to vector<1x8xf32>
    %7 = vector.broadcast %6 : vector<1x8xf32> to vector<8x8xf32>
    %8 = arith.addf %4, %7 : vector<8x8xf32>
    %c0_8 = arith.constant 0 : index
    %c0_9 = arith.constant 0 : index
    %c0_10 = arith.constant 0 : index
    %c0_11 = arith.constant 0 : index
    %9 = vector.load %arg9[%c0_8, %c0_9, %c0_10, %c0_11] : memref<1x4x8x8xf32, #tpu.memory_space<vmem>>, vector<1x1x8x8xf32>
    %10 = vector.shape_cast %9 : vector<1x1x8x8xf32> to vector<8x8xf32>
    %11 = vector.shape_cast %8 : vector<8x8xf32> to vector<1x1x8x8xf32>
    tpu.vector_store %arg9[%c0_8, %c0_9, %c0_10, %c0_11], %11 {strides = array<i32>} : memref<1x4x8x8xf32, #tpu.memory_space<vmem>>, vector<1x1x8x8xf32>,
    %c0_12 = arith.constant 0 : index
    %c0_13 = arith.constant 0 : index
    %c0_14 = arith.constant 0 : index
    %12 = vector.load %arg4[%c0_12, %c0_13, %c0_14] : memref<4x32x8xf32, #tpu.memory_space<vmem>>, vector<1x32x8xf32>
    %13 = vector.shape_cast %12 : vector<1x32x8xf32> to vector<32x8xf32>
    %cst_15 = arith.constant dense<0.000000e+00> : vector<8x8xf32>
    %14 = tpu.matmul %1, %13, %cst_15 {dimension_numbers = #tpu.dot_dimension_numbers<[1], [0], [0], [1], [0, 0, 1, 1], [], []>} : vector<8x32xf32>, vector<32x8xf32>, vector<8x8xf32> -> vector<8x8xf32>
    %c0_16 = arith.constant 0 : index
    %c0_17 = arith.constant 0 : index
    %c0_18 = arith.constant 0 : index
    %15 = vector.load %arg7[%c0_16, %c0_17, %c0_18] : memref<4x1x8xf32, #tpu.memory_space<vmem>>, vector<1x1x8xf32>
    %16 = vector.shape_cast %15 : vector<1x1x8xf32> to vector<1x8xf32>
    %17 = vector.broadcast %16 : vector<1x8xf32> to vector<8x8xf32>
    %18 = arith.addf %14, %17 : vector<8x8xf32>
    %c0_19 = arith.constant 0 : index
    %c0_20 = arith.constant 0 : index
    %c0_21 = arith.constant 0 : index
    %c0_22 = arith.constant 0 : index
    %19 = vector.load %arg10[%c0_19, %c0_20, %c0_21, %c0_22] : memref<1x4x8x8xf32, #tpu.memory_space<vmem>>, vector<1x1x8x8xf32>
    %20 = vector.shape_cast %19 : vector<1x1x8x8xf32> to vector<8x8xf32>
    %21 = vector.shape_cast %18 : vector<8x8xf32> to vector<1x1x8x8xf32>
    tpu.vector_store %arg10[%c0_19, %c0_20, %c0_21, %c0_22], %21 {strides = array<i32>} : memref<1x4x8x8xf32, #tpu.memory_space<vmem>>, vector<1x1x8x8xf32>,
    %c0_23 = arith.constant 0 : index
    %c0_24 = arith.constant 0 : index
    %c0_25 = arith.constant 0 : index
    %22 = vector.load %arg5[%c0_23, %c0_24, %c0_25] : memref<4x32x8xf32, #tpu.memory_space<vmem>>, vector<1x32x8xf32>
    %23 = vector.shape_cast %22 : vector<1x32x8xf32> to vector<32x8xf32>
    %cst_26 = arith.constant dense<0.000000e+00> : vector<8x8xf32>
    %24 = tpu.matmul %1, %23, %cst_26 {dimension_numbers = #tpu.dot_dimension_numbers<[1], [0], [0], [1], [0, 0, 1, 1], [], []>} : vector<8x32xf32>, vector<32x8xf32>, vector<8x8xf32> -> vector<8x8xf32>
    %c0_27 = arith.constant 0 : index
    %c0_28 = arith.constant 0 : index
    %c0_29 = arith.constant 0 : index
    %25 = vector.load %arg8[%c0_27, %c0_28, %c0_29] : memref<4x1x8xf32, #tpu.memory_space<vmem>>, vector<1x1x8xf32>
    %26 = vector.shape_cast %25 : vector<1x1x8xf32> to vector<1x8xf32>
    %27 = vector.broadcast %26 : vector<1x8xf32> to vector<8x8xf32>
    %28 = arith.addf %24, %27 : vector<8x8xf32>
    %c0_30 = arith.constant 0 : index
    %c0_31 = arith.constant 0 : index
    %c0_32 = arith.constant 0 : index
    %c0_33 = arith.constant 0 : index
    %29 = vector.load %arg11[%c0_30, %c0_31, %c0_32, %c0_33] : memref<1x4x8x8xf32, #tpu.memory_space<vmem>>, vector<1x1x8x8xf32>
    %30 = vector.shape_cast %29 : vector<1x1x8x8xf32> to vector<8x8xf32>
    %31 = vector.shape_cast %28 : vector<8x8xf32> to vector<1x1x8x8xf32>
    tpu.vector_store %arg11[%c0_30, %c0_31, %c0_32, %c0_33], %31 {strides = array<i32>} : memref<1x4x8x8xf32, #tpu.memory_space<vmem>>, vector<1x1x8x8xf32>,
    %c1 = arith.constant 1 : index
    %c0_34 = arith.constant 0 : index
    %c0_35 = arith.constant 0 : index
    %32 = vector.load %arg3[%c1, %c0_34, %c0_35] : memref<4x32x8xf32, #tpu.memory_space<vmem>>, vector<1x32x8xf32>
    %33 = vector.shape_cast %32 : vector<1x32x8xf32> to vector<32x8xf32>
    %cst_36 = arith.constant dense<0.000000e+00> : vector<8x8xf32>
    %34 = tpu.matmul %1, %33, %cst_36 {dimension_numbers = #tpu.dot_dimension_numbers<[1], [0], [0], [1], [0, 0, 1, 1], [], []>} : vector<8x32xf32>, vector<32x8xf32>, vector<8x8xf32> -> vector<8x8xf32>
    %c1_37 = arith.constant 1 : index
    %c0_38 = arith.constant 0 : index
    %c0_39 = arith.constant 0 : index
    %35 = vector.load %arg6[%c1_37, %c0_38, %c0_39] : memref<4x1x8xf32, #tpu.memory_space<vmem>>, vector<1x1x8xf32>
    %36 = vector.shape_cast %35 : vector<1x1x8xf32> to vector<1x8xf32>
    %37 = vector.broadcast %36 : vector<1x8xf32> to vector<8x8xf32>
    %38 = arith.addf %34, %37 : vector<8x8xf32>
    %c0_40 = arith.constant 0 : index
    %c1_41 = arith.constant 1 : index
    %c0_42 = arith.constant 0 : index
    %c0_43 = arith.constant 0 : index
    %39 = vector.load %arg9[%c0_40, %c1_41, %c0_42, %c0_43] : memref<1x4x8x8xf32, #tpu.memory_space<vmem>>, vector<1x1x8x8xf32>
    %40 = vector.shape_cast %39 : vector<1x1x8x8xf32> to vector<8x8xf32>
    %41 = vector.shape_cast %38 : vector<8x8xf32> to vector<1x1x8x8xf32>
    tpu.vector_store %arg9[%c0_40, %c1_41, %c0_42, %c0_43], %41 {strides = array<i32>} : memref<1x4x8x8xf32, #tpu.memory_space<vmem>>, vector<1x1x8x8xf32>,
    %c1_44 = arith.constant 1 : index
    %c0_45 = arith.constant 0 : index
    %c0_46 = arith.constant 0 : index
    %42 = vector.load %arg4[%c1_44, %c0_45, %c0_46] : memref<4x32x8xf32, #tpu.memory_space<vmem>>, vector<1x32x8xf32>
    %43 = vector.shape_cast %42 : vector<1x32x8xf32> to vector<32x8xf32>
    %cst_47 = arith.constant dense<0.000000e+00> : vector<8x8xf32>
    %44 = tpu.matmul %1, %43, %cst_47 {dimension_numbers = #tpu.dot_dimension_numbers<[1], [0], [0], [1], [0, 0, 1, 1], [], []>} : vector<8x32xf32>, vector<32x8xf32>, vector<8x8xf32> -> vector<8x8xf32>
    %c1_48 = arith.constant 1 : index
    %c0_49 = arith.constant 0 : index
    %c0_50 = arith.constant 0 : index
    %45 = vector.load %arg7[%c1_48, %c0_49, %c0_50] : memref<4x1x8xf32, #tpu.memory_space<vmem>>, vector<1x1x8xf32>
    %46 = vector.shape_cast %45 : vector<1x1x8xf32> to vector<1x8xf32>
    %47 = vector.broadcast %46 : vector<1x8xf32> to vector<8x8xf32>
    %48 = arith.addf %44, %47 : vector<8x8xf32>
    %c0_51 = arith.constant 0 : index
    %c1_52 = arith.constant 1 : index
    %c0_53 = arith.constant 0 : index
    %c0_54 = arith.constant 0 : index
    %49 = vector.load %arg10[%c0_51, %c1_52, %c0_53, %c0_54] : memref<1x4x8x8xf32, #tpu.memory_space<vmem>>, vector<1x1x8x8xf32>
    %50 = vector.shape_cast %49 : vector<1x1x8x8xf32> to vector<8x8xf32>
    %51 = vector.shape_cast %48 : vector<8x8xf32> to vector<1x1x8x8xf32>
    tpu.vector_store %arg10[%c0_51, %c1_52, %c0_53, %c0_54], %51 {strides = array<i32>} : memref<1x4x8x8xf32, #tpu.memory_space<vmem>>, vector<1x1x8x8xf32>,
    %c1_55 = arith.constant 1 : index
    %c0_56 = arith.constant 0 : index
    %c0_57 = arith.constant 0 : index
    %52 = vector.load %arg5[%c1_55, %c0_56, %c0_57] : memref<4x32x8xf32, #tpu.memory_space<vmem>>, vector<1x32x8xf32>
    %53 = vector.shape_cast %52 : vector<1x32x8xf32> to vector<32x8xf32>
    %cst_58 = arith.constant dense<0.000000e+00> : vector<8x8xf32>
    %54 = tpu.matmul %1, %53, %cst_58 {dimension_numbers = #tpu.dot_dimension_numbers<[1], [0], [0], [1], [0, 0, 1, 1], [], []>} : vector<8x32xf32>, vector<32x8xf32>, vector<8x8xf32> -> vector<8x8xf32>
    %c1_59 = arith.constant 1 : index
    %c0_60 = arith.constant 0 : index
    %c0_61 = arith.constant 0 : index
    %55 = vector.load %arg8[%c1_59, %c0_60, %c0_61] : memref<4x1x8xf32, #tpu.memory_space<vmem>>, vector<1x1x8xf32>
    %56 = vector.shape_cast %55 : vector<1x1x8xf32> to vector<1x8xf32>
    %57 = vector.broadcast %56 : vector<1x8xf32> to vector<8x8xf32>
    %58 = arith.addf %54, %57 : vector<8x8xf32>
    %c0_62 = arith.constant 0 : index
    %c1_63 = arith.constant 1 : index
    %c0_64 = arith.constant 0 : index
    %c0_65 = arith.constant 0 : index
    %59 = vector.load %arg11[%c0_62, %c1_63, %c0_64, %c0_65] : memref<1x4x8x8xf32, #tpu.memory_space<vmem>>, vector<1x1x8x8xf32>
    %60 = vector.shape_cast %59 : vector<1x1x8x8xf32> to vector<8x8xf32>
    %61 = vector.shape_cast %58 : vector<8x8xf32> to vector<1x1x8x8xf32>
    tpu.vector_store %arg11[%c0_62, %c1_63, %c0_64, %c0_65], %61 {strides = array<i32>} : memref<1x4x8x8xf32, #tpu.memory_space<vmem>>, vector<1x1x8x8xf32>,
    %c2 = arith.constant 2 : index
    %c0_66 = arith.constant 0 : index
    %c0_67 = arith.constant 0 : index
    %62 = vector.load %arg3[%c2, %c0_66, %c0_67] : memref<4x32x8xf32, #tpu.memory_space<vmem>>, vector<1x32x8xf32>
    %63 = vector.shape_cast %62 : vector<1x32x8xf32> to vector<32x8xf32>
    %cst_68 = arith.constant dense<0.000000e+00> : vector<8x8xf32>
    %64 = tpu.matmul %1, %63, %cst_68 {dimension_numbers = #tpu.dot_dimension_numbers<[1], [0], [0], [1], [0, 0, 1, 1], [], []>} : vector<8x32xf32>, vector<32x8xf32>, vector<8x8xf32> -> vector<8x8xf32>
    %c2_69 = arith.constant 2 : index
    %c0_70 = arith.constant 0 : index
    %c0_71 = arith.constant 0 : index
    %65 = vector.load %arg6[%c2_69, %c0_70, %c0_71] : memref<4x1x8xf32, #tpu.memory_space<vmem>>, vector<1x1x8xf32>
    %66 = vector.shape_cast %65 : vector<1x1x8xf32> to vector<1x8xf32>
    %67 = vector.broadcast %66 : vector<1x8xf32> to vector<8x8xf32>
    %68 = arith.addf %64, %67 : vector<8x8xf32>
    %c0_72 = arith.constant 0 : index
    %c2_73 = arith.constant 2 : index
    %c0_74 = arith.constant 0 : index
    %c0_75 = arith.constant 0 : index
    %69 = vector.load %arg9[%c0_72, %c2_73, %c0_74, %c0_75] : memref<1x4x8x8xf32, #tpu.memory_space<vmem>>, vector<1x1x8x8xf32>
    %70 = vector.shape_cast %69 : vector<1x1x8x8xf32> to vector<8x8xf32>
    %71 = vector.shape_cast %68 : vector<8x8xf32> to vector<1x1x8x8xf32>
    tpu.vector_store %arg9[%c0_72, %c2_73, %c0_74, %c0_75], %71 {strides = array<i32>} : memref<1x4x8x8xf32, #tpu.memory_space<vmem>>, vector<1x1x8x8xf32>,
    %c2_76 = arith.constant 2 : index
    %c0_77 = arith.constant 0 : index
    %c0_78 = arith.constant 0 : index
    %72 = vector.load %arg4[%c2_76, %c0_77, %c0_78] : memref<4x32x8xf32, #tpu.memory_space<vmem>>, vector<1x32x8xf32>
    %73 = vector.shape_cast %72 : vector<1x32x8xf32> to vector<32x8xf32>
    %cst_79 = arith.constant dense<0.000000e+00> : vector<8x8xf32>
    %74 = tpu.matmul %1, %73, %cst_79 {dimension_numbers = #tpu.dot_dimension_numbers<[1], [0], [0], [1], [0, 0, 1, 1], [], []>} : vector<8x32xf32>, vector<32x8xf32>, vector<8x8xf32> -> vector<8x8xf32>
    %c2_80 = arith.constant 2 : index
    %c0_81 = arith.constant 0 : index
    %c0_82 = arith.constant 0 : index
    %75 = vector.load %arg7[%c2_80, %c0_81, %c0_82] : memref<4x1x8xf32, #tpu.memory_space<vmem>>, vector<1x1x8xf32>
    %76 = vector.shape_cast %75 : vector<1x1x8xf32> to vector<1x8xf32>
    %77 = vector.broadcast %76 : vector<1x8xf32> to vector<8x8xf32>
    %78 = arith.addf %74, %77 : vector<8x8xf32>
    %c0_83 = arith.constant 0 : index
    %c2_84 = arith.constant 2 : index
    %c0_85 = arith.constant 0 : index
    %c0_86 = arith.constant 0 : index
    %79 = vector.load %arg10[%c0_83, %c2_84, %c0_85, %c0_86] : memref<1x4x8x8xf32, #tpu.memory_space<vmem>>, vector<1x1x8x8xf32>
    %80 = vector.shape_cast %79 : vector<1x1x8x8xf32> to vector<8x8xf32>
    %81 = vector.shape_cast %78 : vector<8x8xf32> to vector<1x1x8x8xf32>
    tpu.vector_store %arg10[%c0_83, %c2_84, %c0_85, %c0_86], %81 {strides = array<i32>} : memref<1x4x8x8xf32, #tpu.memory_space<vmem>>, vector<1x1x8x8xf32>,
    %c2_87 = arith.constant 2 : index
    %c0_88 = arith.constant 0 : index
    %c0_89 = arith.constant 0 : index
    %82 = vector.load %arg5[%c2_87, %c0_88, %c0_89] : memref<4x32x8xf32, #tpu.memory_space<vmem>>, vector<1x32x8xf32>
    %83 = vector.shape_cast %82 : vector<1x32x8xf32> to vector<32x8xf32>
    %cst_90 = arith.constant dense<0.000000e+00> : vector<8x8xf32>
    %84 = tpu.matmul %1, %83, %cst_90 {dimension_numbers = #tpu.dot_dimension_numbers<[1], [0], [0], [1], [0, 0, 1, 1], [], []>} : vector<8x32xf32>, vector<32x8xf32>, vector<8x8xf32> -> vector<8x8xf32>
    %c2_91 = arith.constant 2 : index
    %c0_92 = arith.constant 0 : index
    %c0_93 = arith.constant 0 : index
    %85 = vector.load %arg8[%c2_91, %c0_92, %c0_93] : memref<4x1x8xf32, #tpu.memory_space<vmem>>, vector<1x1x8xf32>
    %86 = vector.shape_cast %85 : vector<1x1x8xf32> to vector<1x8xf32>
    %87 = vector.broadcast %86 : vector<1x8xf32> to vector<8x8xf32>
    %88 = arith.addf %84, %87 : vector<8x8xf32>
    %c0_94 = arith.constant 0 : index
    %c2_95 = arith.constant 2 : index
    %c0_96 = arith.constant 0 : index
    %c0_97 = arith.constant 0 : index
    %89 = vector.load %arg11[%c0_94, %c2_95, %c0_96, %c0_97] : memref<1x4x8x8xf32, #tpu.memory_space<vmem>>, vector<1x1x8x8xf32>
    %90 = vector.shape_cast %89 : vector<1x1x8x8xf32> to vector<8x8xf32>
    %91 = vector.shape_cast %88 : vector<8x8xf32> to vector<1x1x8x8xf32>
    tpu.vector_store %arg11[%c0_94, %c2_95, %c0_96, %c0_97], %91 {strides = array<i32>} : memref<1x4x8x8xf32, #tpu.memory_space<vmem>>, vector<1x1x8x8xf32>,
    %c3 = arith.constant 3 : index
    %c0_98 = arith.constant 0 : index
    %c0_99 = arith.constant 0 : index
    %92 = vector.load %arg3[%c3, %c0_98, %c0_99] : memref<4x32x8xf32, #tpu.memory_space<vmem>>, vector<1x32x8xf32>
    %93 = vector.shape_cast %92 : vector<1x32x8xf32> to vector<32x8xf32>
    %cst_100 = arith.constant dense<0.000000e+00> : vector<8x8xf32>
    %94 = tpu.matmul %1, %93, %cst_100 {dimension_numbers = #tpu.dot_dimension_numbers<[1], [0], [0], [1], [0, 0, 1, 1], [], []>} : vector<8x32xf32>, vector<32x8xf32>, vector<8x8xf32> -> vector<8x8xf32>
    %c3_101 = arith.constant 3 : index
    %c0_102 = arith.constant 0 : index
    %c0_103 = arith.constant 0 : index
    %95 = vector.load %arg6[%c3_101, %c0_102, %c0_103] : memref<4x1x8xf32, #tpu.memory_space<vmem>>, vector<1x1x8xf32>
    %96 = vector.shape_cast %95 : vector<1x1x8xf32> to vector<1x8xf32>
    %97 = vector.broadcast %96 : vector<1x8xf32> to vector<8x8xf32>
    %98 = arith.addf %94, %97 : vector<8x8xf32>
    %c0_104 = arith.constant 0 : index
    %c3_105 = arith.constant 3 : index
    %c0_106 = arith.constant 0 : index
    %c0_107 = arith.constant 0 : index
    %99 = vector.load %arg9[%c0_104, %c3_105, %c0_106, %c0_107] : memref<1x4x8x8xf32, #tpu.memory_space<vmem>>, vector<1x1x8x8xf32>
    %100 = vector.shape_cast %99 : vector<1x1x8x8xf32> to vector<8x8xf32>
    %101 = vector.shape_cast %98 : vector<8x8xf32> to vector<1x1x8x8xf32>
    tpu.vector_store %arg9[%c0_104, %c3_105, %c0_106, %c0_107], %101 {strides = array<i32>} : memref<1x4x8x8xf32, #tpu.memory_space<vmem>>, vector<1x1x8x8xf32>,
    %c3_108 = arith.constant 3 : index
    %c0_109 = arith.constant 0 : index
    %c0_110 = arith.constant 0 : index
    %102 = vector.load %arg4[%c3_108, %c0_109, %c0_110] : memref<4x32x8xf32, #tpu.memory_space<vmem>>, vector<1x32x8xf32>
    %103 = vector.shape_cast %102 : vector<1x32x8xf32> to vector<32x8xf32>
    %cst_111 = arith.constant dense<0.000000e+00> : vector<8x8xf32>
    %104 = tpu.matmul %1, %103, %cst_111 {dimension_numbers = #tpu.dot_dimension_numbers<[1], [0], [0], [1], [0, 0, 1, 1], [], []>} : vector<8x32xf32>, vector<32x8xf32>, vector<8x8xf32> -> vector<8x8xf32>
    %c3_112 = arith.constant 3 : index
    %c0_113 = arith.constant 0 : index
    %c0_114 = arith.constant 0 : index
    %105 = vector.load %arg7[%c3_112, %c0_113, %c0_114] : memref<4x1x8xf32, #tpu.memory_space<vmem>>, vector<1x1x8xf32>
    %106 = vector.shape_cast %105 : vector<1x1x8xf32> to vector<1x8xf32>
    %107 = vector.broadcast %106 : vector<1x8xf32> to vector<8x8xf32>
    %108 = arith.addf %104, %107 : vector<8x8xf32>
    %c0_115 = arith.constant 0 : index
    %c3_116 = arith.constant 3 : index
    %c0_117 = arith.constant 0 : index
    %c0_118 = arith.constant 0 : index
    %109 = vector.load %arg10[%c0_115, %c3_116, %c0_117, %c0_118] : memref<1x4x8x8xf32, #tpu.memory_space<vmem>>, vector<1x1x8x8xf32>
    %110 = vector.shape_cast %109 : vector<1x1x8x8xf32> to vector<8x8xf32>
    %111 = vector.shape_cast %108 : vector<8x8xf32> to vector<1x1x8x8xf32>
    tpu.vector_store %arg10[%c0_115, %c3_116, %c0_117, %c0_118], %111 {strides = array<i32>} : memref<1x4x8x8xf32, #tpu.memory_space<vmem>>, vector<1x1x8x8xf32>,
    %c3_119 = arith.constant 3 : index
    %c0_120 = arith.constant 0 : index
    %c0_121 = arith.constant 0 : index
    %112 = vector.load %arg5[%c3_119, %c0_120, %c0_121] : memref<4x32x8xf32, #tpu.memory_space<vmem>>, vector<1x32x8xf32>
    %113 = vector.shape_cast %112 : vector<1x32x8xf32> to vector<32x8xf32>
    %cst_122 = arith.constant dense<0.000000e+00> : vector<8x8xf32>
    %114 = tpu.matmul %1, %113, %cst_122 {dimension_numbers = #tpu.dot_dimension_numbers<[1], [0], [0], [1], [0, 0, 1, 1], [], []>} : vector<8x32xf32>, vector<32x8xf32>, vector<8x8xf32> -> vector<8x8xf32>
    %c3_123 = arith.constant 3 : index
    %c0_124 = arith.constant 0 : index
    %c0_125 = arith.constant 0 : index
    %115 = vector.load %arg8[%c3_123, %c0_124, %c0_125] : memref<4x1x8xf32, #tpu.memory_space<vmem>>, vector<1x1x8xf32>
    %116 = vector.shape_cast %115 : vector<1x1x8xf32> to vector<1x8xf32>
    %117 = vector.broadcast %116 : vector<1x8xf32> to vector<8x8xf32>
    %118 = arith.addf %114, %117 : vector<8x8xf32>
    %c0_126 = arith.constant 0 : index
    %c3_127 = arith.constant 3 : index
    %c0_128 = arith.constant 0 : index
    %c0_129 = arith.constant 0 : index
    %119 = vector.load %arg11[%c0_126, %c3_127, %c0_128, %c0_129] : memref<1x4x8x8xf32, #tpu.memory_space<vmem>>, vector<1x1x8x8xf32>
    %120 = vector.shape_cast %119 : vector<1x1x8x8xf32> to vector<8x8xf32>
    %121 = vector.shape_cast %118 : vector<8x8xf32> to vector<1x1x8x8xf32>
    tpu.vector_store %arg11[%c0_126, %c3_127, %c0_128, %c0_129], %121 {strides = array<i32>} : memref<1x4x8x8xf32, #tpu.memory_space<vmem>>, vector<1x1x8x8xf32>,
    return
  }
  func.func @transform_0(%arg0: i32, %arg1: i32) -> (i32, i32, i32) {
    %c0_i32 = arith.constant 0 : i32
    %c0_i32_0 = arith.constant 0 : i32
    return %arg0, %arg1, %c0_i32 : i32, i32, i32
  }
  func.func @transform_1(%arg0: i32, %arg1: i32) -> (i32, i32, i32) {
    %c0_i32 = arith.constant 0 : i32
    %c0_i32_0 = arith.constant 0 : i32
    %c0_i32_1 = arith.constant 0 : i32
    %c0_i32_2 = arith.constant 0 : i32
    return %c0_i32, %c0_i32_0, %c0_i32_1 : i32, i32, i32
  }
  func.func @transform_2(%arg0: i32, %arg1: i32) -> (i32, i32, i32) {
    %c0_i32 = arith.constant 0 : i32
    %c0_i32_0 = arith.constant 0 : i32
    %c0_i32_1 = arith.constant 0 : i32
    %c0_i32_2 = arith.constant 0 : i32
    return %c0_i32, %c0_i32_0, %c0_i32_1 : i32, i32, i32
  }
  func.func @transform_3(%arg0: i32, %arg1: i32) -> (i32, i32, i32) {
    %c0_i32 = arith.constant 0 : i32
    %c0_i32_0 = arith.constant 0 : i32
    %c0_i32_1 = arith.constant 0 : i32
    %c0_i32_2 = arith.constant 0 : i32
    return %c0_i32, %c0_i32_0, %c0_i32_1 : i32, i32, i32
  }
  func.func @transform_4(%arg0: i32, %arg1: i32) -> (i32, i32, i32) {
    %c0_i32 = arith.constant 0 : i32
    %c0_i32_0 = arith.constant 0 : i32
    %c0_i32_1 = arith.constant 0 : i32
    %c0_i32_2 = arith.constant 0 : i32
    return %c0_i32, %c0_i32_0, %c0_i32_1 : i32, i32, i32
  }
  func.func @transform_5(%arg0: i32, %arg1: i32) -> (i32, i32, i32) {
    %c0_i32 = arith.constant 0 : i32
    %c0_i32_0 = arith.constant 0 : i32
    %c0_i32_1 = arith.constant 0 : i32
    %c0_i32_2 = arith.constant 0 : i32
    return %c0_i32, %c0_i32_0, %c0_i32_1 : i32, i32, i32
  }
  func.func @transform_6(%arg0: i32, %arg1: i32) -> (i32, i32, i32) {
    %c0_i32 = arith.constant 0 : i32
    %c0_i32_0 = arith.constant 0 : i32
    %c0_i32_1 = arith.constant 0 : i32
    %c0_i32_2 = arith.constant 0 : i32
    return %c0_i32, %c0_i32_0, %c0_i32_1 : i32, i32, i32
  }
  func.func @transform_7(%arg0: i32, %arg1: i32) -> (i32, i32, i32, i32) {
    %c0_i32 = arith.constant 0 : i32
    %c0_i32_0 = arith.constant 0 : i32
    %c0_i32_1 = arith.constant 0 : i32
    return %arg0, %c0_i32, %arg1, %c0_i32_0 : i32, i32, i32, i32
  }
  func.func @transform_8(%arg0: i32, %arg1: i32) -> (i32, i32, i32, i32) {
    %c0_i32 = arith.constant 0 : i32
    %c0_i32_0 = arith.constant 0 : i32
    %c0_i32_1 = arith.constant 0 : i32
    return %arg0, %c0_i32, %arg1, %c0_i32_0 : i32, i32, i32, i32
  }
  func.func @transform_9(%arg0: i32, %arg1: i32) -> (i32, i32, i32, i32) {
    %c0_i32 = arith.constant 0 : i32
    %c0_i32_0 = arith.constant 0 : i32
    %c0_i32_1 = arith.constant 0 : i32
    return %arg0, %c0_i32, %arg1, %c0_i32_0 : i32, i32, i32, i32
  }
}

</mosaic_0001>

<llo_original>
// kernel: tpu_custom_call.1
$region0: #{tpu_custom_call.1}
  #allocation0 [shape = 'u32[]', space=smem, size = 0x4, offset = 0x4, fixed_abs, tag = 'smem constant byte address 0x4 - core index']
  #allocation1 [shape = 'u32[144,128]{1,0:T(1,128)}', space=vmem, size = 0x12000, scoped, tag = 'internal scratch']
  %s0 = inlined_call_operand.hbm [shape: f32[2,8,32], index: 0, kind: input, shape index: {}]
  %s1 = inlined_call_operand.hbm [shape: f32[4,32,8], index: 1, kind: input, shape index: {}]
  %s2 = inlined_call_operand.hbm [shape: f32[4,32,8], index: 2, kind: input, shape index: {}]
  %s3 = inlined_call_operand.hbm [shape: f32[4,32,8], index: 3, kind: input, shape index: {}]
  %s4 = inlined_call_operand.hbm [shape: f32[4,1,8], index: 4, kind: input, shape index: {}]
  %s5 = inlined_call_operand.hbm [shape: f32[4,1,8], index: 5, kind: input, shape index: {}]
  %s6 = inlined_call_operand.hbm [shape: f32[4,1,8], index: 6, kind: input, shape index: {}]
  %s7 = inlined_call_operand.hbm [shape: f32[2,4,8,8], index: 7, kind: output, shape index: {0}]
  %s8 = inlined_call_operand.hbm [shape: f32[2,4,8,8], index: 8, kind: output, shape index: {1}]
  %s9 = inlined_call_operand.hbm [shape: f32[2,4,8,8], index: 9, kind: output, shape index: {2}]
  %10 = xla_tuple %s7, %s8, %s9
  %s11 = sld [smem:[#allocation0]]
  $region105: #{tpu_custom_call.1} parent=0
    _
  %s13 = ssub.s32 1, %s11
  %s14 = scalar_select 0, %s13, %s11
  $region1: #{tpu_custom_call.1} parent=0
    #allocation2 [shape = 'u8[8192]{0}', space=vmem, size = 0x2000, scoped, tag = 'input window, operand 0']
    #allocation3 [shape = 's32[2]{0}', space=sflag, size = 0x8, scoped, tag = 'scoped memory for tpu_custom_call.1']
    #allocation4 [shape = 's32[2]{0}', space=sflag, size = 0x8, scoped, tag = 'scoped memory for tpu_custom_call.1']
    #allocation5 [shape = 'u8[65536]{0}', space=vmem, size = 0x10000, scoped, tag = 'input window, operand 1, single buffered']
    #allocation6 [shape = 's32[1]{0}', space=sflag, size = 0x4, scoped, tag = 'scoped memory for tpu_custom_call.1']
    #allocation7 [shape = 'u8[65536]{0}', space=vmem, size = 0x10000, scoped, tag = 'input window, operand 2, single buffered']
    #allocation8 [shape = 'u8[65536]{0}', space=vmem, size = 0x10000, scoped, tag = 'input window, operand 3, single buffered']
    #allocation9 [shape = 's32[1]{0}', space=sflag, size = 0x4, scoped, tag = 'scoped memory for tpu_custom_call.1']
    #allocation10 [shape = 'u8[2048]{0}', space=vmem, size = 0x800, scoped, tag = 'input window, operand 4, single buffered']
    #allocation11 [shape = 'u8[2048]{0}', space=vmem, size = 0x800, scoped, tag = 'input window, operand 5, single buffered']
    #allocation12 [shape = 's32[1]{0}', space=sflag, size = 0x4, scoped, tag = 'scoped memory for tpu_custom_call.1']
    #allocation13 [shape = 'u8[2048]{0}', space=vmem, size = 0x800, scoped, tag = 'input window, operand 6, single buffered']
    #allocation14 [shape = 'u8[32768]{0}', space=vmem, size = 0x8000, scoped, tag = 'output window, operand 0']
    #allocation15 [shape = 'u8[32768]{0}', space=vmem, size = 0x8000, scoped, tag = 'output window, operand 1']
    #allocation16 [shape = 's32[2]{0}', space=sflag, size = 0x8, scoped, tag = 'scoped memory for tpu_custom_call.1']
    #allocation17 [shape = 'u8[32768]{0}', space=vmem, size = 0x8000, scoped, tag = 'output window, operand 2']
    %15 = vsyncpa [#allocation3], 0
    %s16 = scalar_lea.sflag [#allocation3], 1
    %17 = vsyncpa %s16, 0
    %18 = vsyncpa [#allocation6], 0
    %19 = vsyncpa [#allocation9], 0
    %20 = vsyncpa [#allocation12], 0
    %21 = vsyncpa [#allocation4], 0
    %s22 = scalar_lea.sflag [#allocation4], 1
    %23 = vsyncpa %s22, 0
    %24 = vsyncpa [#allocation16], 0
    %s25 = scalar_lea.sflag [#allocation16], 1
    %26 = vsyncpa %s25, 0
    loop: start=0, step=1, limit=4
    $region2: #{tpu_custom_call.1} parent=1 // loop_pre_header
      _
    $region3: #{tpu_custom_call.1} parent=1 // loop_header
      %s28 = sphi 0, %s32
      %p29 = scmp.ge.s32.totalorder %s28, 4
      %s35 = sphi 0, %s47
      %s36 = sphi 0, %s43
      %s37 = sphi 0, %s35
      %s38 = sphi 0, %s36
      %s39 = sphi 0, %s37
      %s40 = sphi 0, %s38
      %s52 = sphi 0, %s54
      %s55 = sphi 0, %s52
      %s56 = sphi 0, %s55
      %s72 = sphi 0, %s56
      %s76 = sphi 0, %s76
      %s78 = sphi 0, %s76
      %s79 = sphi 0, %s78
      %s93 = sphi 0, %s79
      %s97 = sphi 0, %s97
      %s99 = sphi 0, %s97
      %s100 = sphi 0, %s99
      %s114 = sphi 0, %s100
      %s118 = sphi 0, %s118
      %s120 = sphi 0, %s118
      %s121 = sphi 0, %s120
      %s135 = sphi 0, %s121
      %s139 = sphi 0, %s139
      %s141 = sphi 0, %s139
      %s142 = sphi 0, %s141
      %s156 = sphi 0, %s142
      %s160 = sphi 0, %s160
      %s162 = sphi 0, %s160
      %s163 = sphi 0, %s162
      %s177 = sphi 0, %s163
      %s181 = sphi 0, %s181
      %s183 = sphi 0, %s181
      %s184 = sphi 0, %s183
      %s198 = sphi 0, %s184
      %s206 = sphi 0, %s208
      %s209 = sphi 0, %s206
      %s210 = sphi 0, %s209
      %s226 = sphi 0, %s210
      %s234 = sphi 0, %s236
      %s237 = sphi 0, %s234
      %s238 = sphi 0, %s237
      %s254 = sphi 0, %s238
      %s262 = sphi 0, %s264
      %s265 = sphi 0, %s262
      %s266 = sphi 0, %s265
      %s282 = sphi 0, %s266
    $region4: #{tpu_custom_call.1} parent=1 // loop_header_branch
      %31 = sbr.rel (%p29) target = $region8
    $region5: #{tpu_custom_call.1} parent=1 // loop_body
      %s33 = ssub.s32 %s28, 1
      %s34 = ssub.s32 %s28, 2
      %s41 = sadd.s32 1, %s36
      %p42 = scmp.ge.s32.totalorder %s41, 1
      %s43 = scalar_select %p42, 0, %s41
      %s44 = sadd.s32 1, %s35
      %s45 = scalar_select %p42, %s44, %s35
      %p46 = scmp.ge.s32.totalorder %s45, 2
      %s47 = scalar_select %p46, 0, %s45
      %s48 = ssub.s32 %s35, %s47
      %s49 = ssub.s32 %s36, %s43
      %s50 = sor.u32 %s48, %s49
      %p51 = scmp.eq.s32.totalorder %s50, 0
      %s53 = sadd.s32 %s52, 1
      %s54 = scalar_select %p51, %s52, %s53
      %p57 = pneg %p51
      %p58 = scmp.eq.s32.totalorder %s28, 1
      %p59 = por %p57, %p58
      %p60 = scmp.ne.s32.totalorder %s52, %s55
      %p61 = scmp.eq.s32.totalorder %s28, 0
      %p62 = por %p60, %p61
      %p63 = scmp.ne.s32.totalorder %s52, %s55
      %p64 = scmp.eq.s32.totalorder %s33, 1
      %p65 = por %p63, %p64
      %p66 = scmp.ne.s32.totalorder %s55, %s56
      %p67 = scmp.eq.s32.totalorder %s33, 0
      %p68 = por %p66, %p67
      %p69 = scmp.ne.s32.totalorder %s55, %s56
      %p70 = scmp.eq.s32.totalorder %s34, 1
      %p71 = por %p69, %p70
      %p73 = scmp.ne.s32.totalorder %s56, %s72
      %p74 = scmp.eq.s32.totalorder %s34, 0
      %p75 = por %p73, %p74
      %s77 = sadd.s32 %s76, 1
      %p80 = scmp.eq.s32.totalorder %s28, 1
      %p81 = scmp.ne.s32.totalorder %s76, %s78
      %p82 = scmp.eq.s32.totalorder %s28, 0
      %p83 = por %p81, %p82
      %p84 = scmp.ne.s32.totalorder %s76, %s78
      %p85 = scmp.eq.s32.totalorder %s33, 1
      %p86 = por %p84, %p85
      %p87 = scmp.ne.s32.totalorder %s78, %s79
      %p88 = scmp.eq.s32.totalorder %s33, 0
      %p89 = por %p87, %p88
      %p90 = scmp.ne.s32.totalorder %s78, %s79
      %p91 = scmp.eq.s32.totalorder %s34, 1
      %p92 = por %p90, %p91
      %p94 = scmp.ne.s32.totalorder %s79, %s93
      %p95 = scmp.eq.s32.totalorder %s34, 0
      %p96 = por %p94, %p95
      %s98 = sadd.s32 %s97, 1
      %p101 = scmp.eq.s32.totalorder %s28, 1
      %p102 = scmp.ne.s32.totalorder %s97, %s99
      %p103 = scmp.eq.s32.totalorder %s28, 0
      %p104 = por %p102, %p103
      %p105 = scmp.ne.s32.totalorder %s97, %s99
      %p106 = scmp.eq.s32.totalorder %s33, 1
      %p107 = por %p105, %p106
      %p108 = scmp.ne.s32.totalorder %s99, %s100
      %p109 = scmp.eq.s32.totalorder %s33, 0
      %p110 = por %p108, %p109
      %p111 = scmp.ne.s32.totalorder %s99, %s100
      %p112 = scmp.eq.s32.totalorder %s34, 1
      %p113 = por %p111, %p112
      %p115 = scmp.ne.s32.totalorder %s100, %s114
      %p116 = scmp.eq.s32.totalorder %s34, 0
      %p117 = por %p115, %p116
      %s119 = sadd.s32 %s118, 1
      %p122 = scmp.eq.s32.totalorder %s28, 1
      %p123 = scmp.ne.s32.totalorder %s118, %s120
      %p124 = scmp.eq.s32.totalorder %s28, 0
      %p125 = por %p123, %p124
      %p126 = scmp.ne.s32.totalorder %s118, %s120
      %p127 = scmp.eq.s32.totalorder %s33, 1
      %p128 = por %p126, %p127
      %p129 = scmp.ne.s32.totalorder %s120, %s121
      %p130 = scmp.eq.s32.totalorder %s33, 0
      %p131 = por %p129, %p130
      %p132 = scmp.ne.s32.totalorder %s120, %s121
      %p133 = scmp.eq.s32.totalorder %s34, 1
      %p134 = por %p132, %p133
      %p136 = scmp.ne.s32.totalorder %s121, %s135
      %p137 = scmp.eq.s32.totalorder %s34, 0
      %p138 = por %p136, %p137
      %s140 = sadd.s32 %s139, 1
      %p143 = scmp.eq.s32.totalorder %s28, 1
      %p144 = scmp.ne.s32.totalorder %s139, %s141
      %p145 = scmp.eq.s32.totalorder %s28, 0
      %p146 = por %p144, %p145
      %p147 = scmp.ne.s32.totalorder %s139, %s141
      %p148 = scmp.eq.s32.totalorder %s33, 1
      %p149 = por %p147, %p148
      %p150 = scmp.ne.s32.totalorder %s141, %s142
      %p151 = scmp.eq.s32.totalorder %s33, 0
      %p152 = por %p150, %p151
      %p153 = scmp.ne.s32.totalorder %s141, %s142
      %p154 = scmp.eq.s32.totalorder %s34, 1
      %p155 = por %p153, %p154
      %p157 = scmp.ne.s32.totalorder %s142, %s156
      %p158 = scmp.eq.s32.totalorder %s34, 0
      %p159 = por %p157, %p158
      %s161 = sadd.s32 %s160, 1
      %p164 = scmp.eq.s32.totalorder %s28, 1
      %p165 = scmp.ne.s32.totalorder %s160, %s162
      %p166 = scmp.eq.s32.totalorder %s28, 0
      %p167 = por %p165, %p166
      %p168 = scmp.ne.s32.totalorder %s160, %s162
      %p169 = scmp.eq.s32.totalorder %s33, 1
      %p170 = por %p168, %p169
      %p171 = scmp.ne.s32.totalorder %s162, %s163
      %p172 = scmp.eq.s32.totalorder %s33, 0
      %p173 = por %p171, %p172
      %p174 = scmp.ne.s32.totalorder %s162, %s163
      %p175 = scmp.eq.s32.totalorder %s34, 1
      %p176 = por %p174, %p175
      %p178 = scmp.ne.s32.totalorder %s163, %s177
      %p179 = scmp.eq.s32.totalorder %s34, 0
      %p180 = por %p178, %p179
      %s182 = sadd.s32 %s181, 1
      %p185 = scmp.eq.s32.totalorder %s28, 1
      %p186 = scmp.ne.s32.totalorder %s181, %s183
      %p187 = scmp.eq.s32.totalorder %s28, 0
      %p188 = por %p186, %p187
      %p189 = scmp.ne.s32.totalorder %s181, %s183
      %p190 = scmp.eq.s32.totalorder %s33, 1
      %p191 = por %p189, %p190
      %p192 = scmp.ne.s32.totalorder %s183, %s184
      %p193 = scmp.eq.s32.totalorder %s33, 0
      %p194 = por %p192, %p193
      %p195 = scmp.ne.s32.totalorder %s183, %s184
      %p196 = scmp.eq.s32.totalorder %s34, 1
      %p197 = por %p195, %p196
      %p199 = scmp.ne.s32.totalorder %s184, %s198
      %p200 = scmp.eq.s32.totalorder %s34, 0
      %p201 = por %p199, %p200
      %s202 = ssub.s32 %s35, %s47
      %s203 = ssub.s32 %s36, %s43
      %s204 = sor.u32 %s202, %s203
      %p205 = scmp.eq.s32.totalorder %s204, 0
      %s207 = sadd.s32 %s206, 1
      %s208 = scalar_select %p205, %s206, %s207
      %p211 = pneg %p205
      %p212 = scmp.eq.s32.totalorder %s28, 1
      %p213 = por %p211, %p212
      %p214 = scmp.ne.s32.totalorder %s206, %s209
      %p215 = scmp.eq.s32.totalorder %s28, 0
      %p216 = por %p214, %p215
      %p217 = scmp.ne.s32.totalorder %s206, %s209
      %p218 = scmp.eq.s32.totalorder %s33, 1
      %p219 = por %p217, %p218
      %p220 = scmp.ne.s32.totalorder %s209, %s210
      %p221 = scmp.eq.s32.totalorder %s33, 0
      %p222 = por %p220, %p221
      %p223 = scmp.ne.s32.totalorder %s209, %s210
      %p224 = scmp.eq.s32.totalorder %s34, 1
      %p225 = por %p223, %p224
      %p227 = scmp.ne.s32.totalorder %s210, %s226
      %p228 = scmp.eq.s32.totalorder %s34, 0
      %p229 = por %p227, %p228
      %s230 = ssub.s32 %s35, %s47
      %s231 = ssub.s32 %s36, %s43
      %s232 = sor.u32 %s230, %s231
      %p233 = scmp.eq.s32.totalorder %s232, 0
      %s235 = sadd.s32 %s234, 1
      %s236 = scalar_select %p233, %s234, %s235
      %p239 = pneg %p233
      %p240 = scmp.eq.s32.totalorder %s28, 1
      %p241 = por %p239, %p240
      %p242 = scmp.ne.s32.totalorder %s234, %s237
      %p243 = scmp.eq.s32.totalorder %s28, 0
      %p244 = por %p242, %p243
      %p245 = scmp.ne.s32.totalorder %s234, %s237
      %p246 = scmp.eq.s32.totalorder %s33, 1
      %p247 = por %p245, %p246
      %p248 = scmp.ne.s32.totalorder %s237, %s238
      %p249 = scmp.eq.s32.totalorder %s33, 0
      %p250 = por %p248, %p249
      %p251 = scmp.ne.s32.totalorder %s237, %s238
      %p252 = scmp.eq.s32.totalorder %s34, 1
      %p253 = por %p251, %p252
      %p255 = scmp.ne.s32.totalorder %s238, %s254
      %p256 = scmp.eq.s32.totalorder %s34, 0
      %p257 = por %p255, %p256
      %s258 = ssub.s32 %s35, %s47
      %s259 = ssub.s32 %s36, %s43
      %s260 = sor.u32 %s258, %s259
      %p261 = scmp.eq.s32.totalorder %s260, 0
      %s263 = sadd.s32 %s262, 1
      %s264 = scalar_select %p261, %s262, %s263
      %p267 = pneg %p261
      %p268 = scmp.eq.s32.totalorder %s28, 1
      %p269 = por %p267, %p268
      %p270 = scmp.ne.s32.totalorder %s262, %s265
      %p271 = scmp.eq.s32.totalorder %s28, 0
      %p272 = por %p270, %p271
      %p273 = scmp.ne.s32.totalorder %s262, %s265
      %p274 = scmp.eq.s32.totalorder %s33, 1
      %p275 = por %p273, %p274
      %p276 = scmp.ne.s32.totalorder %s265, %s266
      %p277 = scmp.eq.s32.totalorder %s33, 0
      %p278 = por %p276, %p277
      %p279 = scmp.ne.s32.totalorder %s265, %s266
      %p280 = scmp.eq.s32.totalorder %s34, 1
      %p281 = por %p279, %p280
      %p283 = scmp.ne.s32.totalorder %s266, %s282
      %p284 = scmp.eq.s32.totalorder %s34, 0
      %p285 = por %p283, %p284
      %p286 = scmp.le.s32.totalorder 1, %s28
      %p287 = scmp.lt.s32.totalorder %s28, 3
      %p288 = pnand %p286, %p287
      %p289 = pneg %p288
      // Predicated region
      $region9: #{tpu_custom_call.1} parent=5 // pred_check
        _
      $region10: #{tpu_custom_call.1} parent=5 // pred_check_branch
        %291 = sbr.rel (%p288) target = $region12
      $region11: #{tpu_custom_call.1} parent=5 // pred_region
        %s292 = ssub.s32 %s28, 1
        // Predicated region
        $region13: #{tpu_custom_call.1} parent=11 // pred_check
          %p293 = pneg %p89
        $region14: #{tpu_custom_call.1} parent=11 // pred_check_branch
          %295 = sbr.rel (%p293) target = $region16
        $region15: #{tpu_custom_call.1} parent=11 // pred_region
          %s297 = ssub.s32 2048, 2048
          %298 = vsyncadd [#allocation6], %s297
          %s299 = sshll.u32 [#allocation5], 4
          %s300 = int_to_ptr.vmem [resolvable:$true] %s299
          %305 = dma.hbm_to_vmem [thread:$0]  %s1, 2048, %s300, [#allocation6], 128, 128, 8
        $region16: #{tpu_custom_call.1} parent=11 // pred_fallthru
          _
        // Predicated region
        $region17: #{tpu_custom_call.1} parent=11 // pred_check
          %p306 = pneg %p110
        $region18: #{tpu_custom_call.1} parent=11 // pred_check_branch
          %308 = sbr.rel (%p306) target = $region20
        $region19: #{tpu_custom_call.1} parent=11 // pred_region
          %s310 = ssub.s32 2048, 2048
          %311 = vsyncadd [#allocation6], %s310
          %s312 = sshll.u32 [#allocation7], 4
          %s313 = int_to_ptr.vmem [resolvable:$true] %s312
          %318 = dma.hbm_to_vmem [thread:$0]  %s2, 2048, %s313, [#allocation6], 128, 128, 8
        $region20: #{tpu_custom_call.1} parent=11 // pred_fallthru
          _
        // Predicated region
        $region21: #{tpu_custom_call.1} parent=11 // pred_check
          %p319 = pneg %p131
        $region22: #{tpu_custom_call.1} parent=11 // pred_check_branch
          %321 = sbr.rel (%p319) target = $region24
        $region23: #{tpu_custom_call.1} parent=11 // pred_region
          %s323 = ssub.s32 2048, 2048
          %324 = vsyncadd [#allocation9], %s323
          %s325 = sshll.u32 [#allocation8], 4
          %s326 = int_to_ptr.vmem [resolvable:$true] %s325
          %331 = dma.hbm_to_vmem [thread:$0]  %s3, 2048, %s326, [#allocation9], 128, 128, 8
        $region24: #{tpu_custom_call.1} parent=11 // pred_fallthru
          _
        // Predicated region
        $region25: #{tpu_custom_call.1} parent=11 // pred_check
          %p332 = pneg %p152
        $region26: #{tpu_custom_call.1} parent=11 // pred_check_branch
          %334 = sbr.rel (%p332) target = $region28
        $region27: #{tpu_custom_call.1} parent=11 // pred_region
          %s336 = ssub.s32 64, 64
          %337 = vsyncadd [#allocation9], %s336
          %s338 = sshll.u32 [#allocation10], 4
          %s339 = int_to_ptr.vmem [resolvable:$true] %s338
          %344 = dma.hbm_to_vmem [thread:$0]  %s4, 64, %s339, [#allocation9], 16, 16, 1
        $region28: #{tpu_custom_call.1} parent=11 // pred_fallthru
          _
        // Predicated region
        $region29: #{tpu_custom_call.1} parent=11 // pred_check
          %p345 = pneg %p173
        $region30: #{tpu_custom_call.1} parent=11 // pred_check_branch
          %347 = sbr.rel (%p345) target = $region32
        $region31: #{tpu_custom_call.1} parent=11 // pred_region
          %s349 = ssub.s32 64, 64
          %350 = vsyncadd [#allocation12], %s349
          %s351 = sshll.u32 [#allocation11], 4
          %s352 = int_to_ptr.vmem [resolvable:$true] %s351
          %357 = dma.hbm_to_vmem [thread:$0]  %s5, 64, %s352, [#allocation12], 16, 16, 1
        $region32: #{tpu_custom_call.1} parent=11 // pred_fallthru
          _
        // Predicated region
        $region33: #{tpu_custom_call.1} parent=11 // pred_check
          %p358 = pneg %p194
        $region34: #{tpu_custom_call.1} parent=11 // pred_check_branch
          %360 = sbr.rel (%p358) target = $region36
        $region35: #{tpu_custom_call.1} parent=11 // pred_region
          %s362 = ssub.s32 64, 64
          %363 = vsyncadd [#allocation12], %s362
          %s364 = sshll.u32 [#allocation13], 4
          %s365 = int_to_ptr.vmem [resolvable:$true] %s364
          %370 = dma.hbm_to_vmem [thread:$0]  %s6, 64, %s365, [#allocation12], 16, 16, 1
        $region36: #{tpu_custom_call.1} parent=11 // pred_fallthru
          _
      $region12: #{tpu_custom_call.1} parent=5 // pred_fallthru
        _
      %p371 = scmp.lt.s32.totalorder %s28, 2
      // Predicated region
      $region37: #{tpu_custom_call.1} parent=5 // pred_check
        %p372 = pneg %p371
      $region38: #{tpu_custom_call.1} parent=5 // pred_check_branch
        %374 = sbr.rel (%p372) target = $region40
      $region39: #{tpu_custom_call.1} parent=5 // pred_region
        // Predicated region
        $region41: #{tpu_custom_call.1} parent=39 // pred_check
          %p375 = pneg %p62
        $region42: #{tpu_custom_call.1} parent=39 // pred_check_branch
          %377 = sbr.rel (%p375) target = $region44
        $region43: #{tpu_custom_call.1} parent=39 // pred_region
          %s378 = sand.u32 %s52, 1
          %s379 = scalar_lea.sflag [#allocation3], %s378
          %s380 = sand.u32 %s52, 1
          %s381 = smul.addr %s380, 8
          %s382 = scalar_lea.vmem [#allocation2], %s381
          %s384 = ssub.s32 128, 128
          %385 = vsyncadd %s379, %s384
          %s386 = sadd.s32 %s36, %s35
          %s387 = smul.addr %s386, 128
          %s388 = scalar_lea.hbm %s0, %s387
          %s390 = sshll.u32 %s382, 4
          %s391 = int_to_ptr.vmem [resolvable:$true] %s390
          %393 = dma.hbm_to_vmem [thread:$0]  %s388, 128, %s391, %s379
        $region44: #{tpu_custom_call.1} parent=39 // pred_fallthru
          _
      $region40: #{tpu_custom_call.1} parent=5 // pred_fallthru
        _
      %p394 = scmp.le.s32.totalorder 1, %s28
      %p395 = scmp.lt.s32.totalorder %s28, 3
      %p396 = pnand %p394, %p395
      %p397 = pneg %p396
      // Predicated region
      $region45: #{tpu_custom_call.1} parent=5 // pred_check
        _
      $region46: #{tpu_custom_call.1} parent=5 // pred_check_branch
        %399 = sbr.rel (%p396) target = $region48
      $region47: #{tpu_custom_call.1} parent=5 // pred_region
        %s400 = ssub.s32 %s28, 1
        %s401 = sand.u32 %s55, 1
        %s402 = scalar_lea.sflag [#allocation3], %s401
        %s403 = sand.u32 %s55, 1
        %s404 = smul.addr %s403, 8
        %s405 = scalar_lea.vmem [#allocation2], %s404
        // Predicated region
        $region49: #{tpu_custom_call.1} parent=47 // pred_check
          %p406 = pneg %p68
        $region50: #{tpu_custom_call.1} parent=47 // pred_check_branch
          %408 = sbr.rel (%p406) target = $region52
        $region51: #{tpu_custom_call.1} parent=47 // pred_region
          %409 = dma.done %s402, 128
        $region52: #{tpu_custom_call.1} parent=47 // pred_fallthru
          _
        // Predicated region
        $region53: #{tpu_custom_call.1} parent=47 // pred_check
          %p410 = pneg %p89
        $region54: #{tpu_custom_call.1} parent=47 // pred_check_branch
          %412 = sbr.rel (%p410) target = $region56
        $region55: #{tpu_custom_call.1} parent=47 // pred_region
          %413 = dma.done [#allocation6], 2048
        $region56: #{tpu_custom_call.1} parent=47 // pred_fallthru
          _
        // Predicated region
        $region57: #{tpu_custom_call.1} parent=47 // pred_check
          %p414 = pneg %p110
        $region58: #{tpu_custom_call.1} parent=47 // pred_check_branch
          %416 = sbr.rel (%p414) target = $region60
        $region59: #{tpu_custom_call.1} parent=47 // pred_region
          %417 = dma.done [#allocation6], 2048
        $region60: #{tpu_custom_call.1} parent=47 // pred_fallthru
          _
        // Predicated region
        $region61: #{tpu_custom_call.1} parent=47 // pred_check
          %p418 = pneg %p131
        $region62: #{tpu_custom_call.1} parent=47 // pred_check_branch
          %420 = sbr.rel (%p418) target = $region64
        $region63: #{tpu_custom_call.1} parent=47 // pred_region
          %421 = dma.done [#allocation9], 2048
        $region64: #{tpu_custom_call.1} parent=47 // pred_fallthru
          _
        // Predicated region
        $region65: #{tpu_custom_call.1} parent=47 // pred_check
          %p422 = pneg %p152
        $region66: #{tpu_custom_call.1} parent=47 // pred_check_branch
          %424 = sbr.rel (%p422) target = $region68
        $region67: #{tpu_custom_call.1} parent=47 // pred_region
          %425 = dma.done [#allocation9], 64
        $region68: #{tpu_custom_call.1} parent=47 // pred_fallthru
          _
        // Predicated region
        $region69: #{tpu_custom_call.1} parent=47 // pred_check
          %p426 = pneg %p173
        $region70: #{tpu_custom_call.1} parent=47 // pred_check_branch
          %428 = sbr.rel (%p426) target = $region72
        $region71: #{tpu_custom_call.1} parent=47 // pred_region
          %429 = dma.done [#allocation12], 64
        $region72: #{tpu_custom_call.1} parent=47 // pred_fallthru
          _
        // Predicated region
        $region73: #{tpu_custom_call.1} parent=47 // pred_check
          %p430 = pneg %p194
        $region74: #{tpu_custom_call.1} parent=47 // pred_check_branch
          %432 = sbr.rel (%p430) target = $region76
        $region75: #{tpu_custom_call.1} parent=47 // pred_region
          %433 = dma.done [#allocation12], 64
        $region76: #{tpu_custom_call.1} parent=47 // pred_fallthru
          _
        %s434 = sand.u32 %s55, 1
        %s435 = scalar_lea.sflag [#allocation3], %s434
        %s436 = sand.u32 %s55, 1
        %s437 = smul.addr %s436, 8
        %s438 = scalar_lea.vmem [#allocation2], %s437
        %p439 = pneg %p68
        %p440 = pneg %p65
        %p441 = pneg %p89
        %p442 = pneg %p86
        %p443 = pneg %p110
        %p444 = pneg %p107
        %p445 = pneg %p131
        %p446 = pneg %p128
        %p447 = pneg %p152
        %p448 = pneg %p149
        %p449 = pneg %p173
        %p450 = pneg %p170
        %p451 = pneg %p194
        %p452 = pneg %p191
        %p453 = pneg %p222
        %p454 = pneg %p219
        %s455 = sand.u32 %s209, 1
        %s456 = scalar_lea.sflag [#allocation4], %s455
        %s457 = sand.u32 %s209, 1
        %s458 = smul.addr %s457, 32
        %s459 = scalar_lea.vmem [#allocation14], %s458
        %p460 = pneg %p250
        %p461 = pneg %p247
        %s462 = sand.u32 %s33, 1
        %s463 = scalar_lea.sflag [#allocation16], %s462
        %s464 = sand.u32 %s237, 1
        %s465 = smul.addr %s464, 32
        %s466 = scalar_lea.vmem [#allocation15], %s465
        %p467 = pneg %p278
        %p468 = pneg %p275
        %s469 = sand.u32 %s33, 1
        %s470 = scalar_lea.sflag [#allocation16], %s469
        %s471 = sand.u32 %s265, 1
        %s472 = smul.addr %s471, 32
        %s473 = scalar_lea.vmem [#allocation17], %s472
        %v474 = vld [vmem:[%s405] sm:$0xff]
        %v475 = vld [vmem:[#allocation5] sm:$0xff]
        %v476 = vld [vmem:[#allocation5 + $0x8] sm:$0xff]
        %v477 = vld [vmem:[#allocation5 + $0x10] sm:$0xff]
        %v478 = vld [vmem:[#allocation5 + $0x18] sm:$0xff]
        %v479 = vld [vmem:[#allocation10] sm:$0x1]
        %v481 = vlaneseq
        %v482 = vshrl.u32 %v481, 7
        %v483 = vsub.s32 0, %v482
        %v484 = vrot.slane %v479, %v483
        %vm486 = vcmask 261120
        %v488 = vsel %vm486, %v474, 0
        %490 = vmatprep.subr.mxu0 0.0
        %491 = vmatpush1.msra.mxu0 %v475
        %492 = vmatprep.subr.mxu0 0.0
        %493 = vmatpush1.msra.mxu0 %v476
        %494 = vmatprep.subr.mxu0 0.0
        %495 = vmatpush1.msra.mxu0 %v477
        %496 = vmatprep.subr.mxu0 0.0
        %497 = vmatpush1.msra.mxu0 %v478
        %498 = vmatprep.subr.mxu0 0.0
        %499 = vmatpush1.msra.mxu0 0.0
        %500 = vmatprep.subr.mxu0 0.0
        %501 = vmatpush1.msra.mxu0 0.0
        %502 = vmatprep.subr.mxu0 0.0
        %503 = vmatpush1.msra.mxu0 0.0
        %504 = vmatprep.subr.mxu0 0.0
        %505 = vmatpush1.msra.mxu0 0.0
        %506 = vmatprep.subr.mxu0 0.0
        %507 = vmatpush1.msra.mxu0 0.0
        %508 = vmatprep.subr.mxu0 0.0
        %509 = vmatpush1.msra.mxu0 0.0
        %510 = vmatprep.subr.mxu0 0.0
        %511 = vmatpush1.msra.mxu0 0.0
        %512 = vmatprep.subr.mxu0 0.0
        %513 = vmatpush1.msra.mxu0 0.0
        %514 = vmatprep.subr.mxu0 0.0
        %515 = vmatpush1.msra.mxu0 0.0
        %516 = vmatprep.subr.mxu0 0.0
        %517 = vmatpush1.msra.mxu0 0.0
        %518 = vmatprep.subr.mxu0 0.0
        %519 = vmatpush1.msra.mxu0 0.0
        %520 = vmatprep.subr.mxu0 0.0
        %521 = vmatpush1.msra.mxu0 0.0
        %522 = vmatprep.subr.mxu0 0.0
        %523 = vmatpush1.msra.mxu0 0.0
        %524 = vmatprep.subr.mxu0 0.0
        %525 = vmatpush1.msra.mxu0 0.0
        %526 = vmatprep.subr.mxu0 0.0
        %527 = vmatpush1.msra.mxu0 0.0
        %528 = vmatprep.subr.mxu0 0.0
        %529 = vmatpush1.msra.mxu0 0.0
        %530 = vmatprep.subr.mxu0 0.0
        %531 = vmatpush1.msra.mxu0 0.0
        %532 = vmatprep.subr.mxu0 0.0
        %533 = vmatpush1.msra.mxu0 0.0
        %534 = vmatprep.subr.mxu0 0.0
        %535 = vmatpush1.msra.mxu0 0.0
        %536 = vmatprep.subr.mxu0 0.0
        %537 = vmatpush1.msra.mxu0 0.0
        %538 = vmatprep.subr.mxu0 0.0
        %539 = vmatpush1.msra.mxu0 0.0
        %540 = vmatprep.subr.mxu0 0.0
        %541 = vmatpush1.msra.mxu0 0.0
        %542 = vmatprep.subr.mxu0 0.0
        %543 = vmatpush1.msra.mxu0 0.0
        %544 = vmatprep.subr.mxu0 0.0
        %545 = vmatpush1.msra.mxu0 0.0
        %546 = vmatprep.subr.mxu0 0.0
        %547 = vmatpush1.msra.mxu0 0.0
        %548 = vmatprep.subr.mxu0 0.0
        %549 = vmatpush1.msra.mxu0 0.0
        %550 = vmatprep.subr.mxu0 0.0
        %551 = vmatpush1.msra.mxu0 0.0
        %552 = vmatprep.subr.mxu0 0.0
        %553 = vmatpush1.msra.mxu0 0.0
        %554 = vmatprep.mubr.f32.mxu0 0.0
        %555 = vmatmul.mubr.f32.gmra.mrb[0].mxu0 %v488
        %v556 = vpop.f32.mrb[0].mxu0
        %v557 = vadd.f32 %v484, %v556
        %v558 = vpop.f32.mrb[0].mxu0
        %559 = vdwg.mxu0
        %vm560 = vcmask 64512
        %561 = vst.msk [vmem:[%s459] sm:$0xff] %vm560, %v557
        %v562 = vld [vmem:[#allocation7] sm:$0xff]
        %v563 = vld [vmem:[#allocation7 + $0x8] sm:$0xff]
        %v564 = vld [vmem:[#allocation7 + $0x10] sm:$0xff]
        %v565 = vld [vmem:[#allocation7 + $0x18] sm:$0xff]
        %v566 = vld [vmem:[#allocation11] sm:$0x1]
        %v568 = vlaneseq
        %v569 = vshrl.u32 %v568, 7
        %v570 = vsub.s32 0, %v569
        %v571 = vrot.slane %v566, %v570
        %573 = vmatprep.subr.mxu0 0.0
        %574 = vmatpush1.msra.mxu0 %v562
        %575 = vmatprep.subr.mxu0 0.0
        %576 = vmatpush1.msra.mxu0 %v563
        %577 = vmatprep.subr.mxu0 0.0
        %578 = vmatpush1.msra.mxu0 %v564
        %579 = vmatprep.subr.mxu0 0.0
        %580 = vmatpush1.msra.mxu0 %v565
        %581 = vmatprep.subr.mxu0 0.0
        %582 = vmatpush1.msra.mxu0 0.0
        %583 = vmatprep.subr.mxu0 0.0
        %584 = vmatpush1.msra.mxu0 0.0
        %585 = vmatprep.subr.mxu0 0.0
        %586 = vmatpush1.msra.mxu0 0.0
        %587 = vmatprep.subr.mxu0 0.0
        %588 = vmatpush1.msra.mxu0 0.0
        %589 = vmatprep.subr.mxu0 0.0
        %590 = vmatpush1.msra.mxu0 0.0
        %591 = vmatprep.subr.mxu0 0.0
        %592 = vmatpush1.msra.mxu0 0.0
        %593 = vmatprep.subr.mxu0 0.0
        %594 = vmatpush1.msra.mxu0 0.0
        %595 = vmatprep.subr.mxu0 0.0
        %596 = vmatpush1.msra.mxu0 0.0
        %597 = vmatprep.subr.mxu0 0.0
        %598 = vmatpush1.msra.mxu0 0.0
        %599 = vmatprep.subr.mxu0 0.0
        %600 = vmatpush1.msra.mxu0 0.0
        %601 = vmatprep.subr.mxu0 0.0
        %602 = vmatpush1.msra.mxu0 0.0
        %603 = vmatprep.subr.mxu0 0.0
        %604 = vmatpush1.msra.mxu0 0.0
        %605 = vmatprep.subr.mxu0 0.0
        %606 = vmatpush1.msra.mxu0 0.0
        %607 = vmatprep.subr.mxu0 0.0
        %608 = vmatpush1.msra.mxu0 0.0
        %609 = vmatprep.subr.mxu0 0.0
        %610 = vmatpush1.msra.mxu0 0.0
        %611 = vmatprep.subr.mxu0 0.0
        %612 = vmatpush1.msra.mxu0 0.0
        %613 = vmatprep.subr.mxu0 0.0
        %614 = vmatpush1.msra.mxu0 0.0
        %615 = vmatprep.subr.mxu0 0.0
        %616 = vmatpush1.msra.mxu0 0.0
        %617 = vmatprep.subr.mxu0 0.0
        %618 = vmatpush1.msra.mxu0 0.0
        %619 = vmatprep.subr.mxu0 0.0
        %620 = vmatpush1.msra.mxu0 0.0
        %621 = vmatprep.subr.mxu0 0.0
        %622 = vmatpush1.msra.mxu0 0.0
        %623 = vmatprep.subr.mxu0 0.0
        %624 = vmatpush1.msra.mxu0 0.0
        %625 = vmatprep.subr.mxu0 0.0
        %626 = vmatpush1.msra.mxu0 0.0
        %627 = vmatprep.subr.mxu0 0.0
        %628 = vmatpush1.msra.mxu0 0.0
        %629 = vmatprep.subr.mxu0 0.0
        %630 = vmatpush1.msra.mxu0 0.0
        %631 = vmatprep.subr.mxu0 0.0
        %632 = vmatpush1.msra.mxu0 0.0
        %633 = vmatprep.subr.mxu0 0.0
        %634 = vmatpush1.msra.mxu0 0.0
        %635 = vmatprep.subr.mxu0 0.0
        %636 = vmatpush1.msra.mxu0 0.0
        %637 = vmatprep.mubr.f32.mxu0 0.0
        %638 = vmatmul.mubr.f32.gmra.mrb[0].mxu0 %v488
        %v639 = vpop.f32.mrb[0].mxu0
        %v640 = vadd.f32 %v571, %v639
        %v641 = vpop.f32.mrb[0].mxu0
        %642 = vdwg.mxu0
        %643 = vst.msk [vmem:[%s466] sm:$0xff] %vm560, %v640
        %v644 = vld [vmem:[#allocation8] sm:$0xff]
        %v645 = vld [vmem:[#allocation8 + $0x8] sm:$0xff]
        %v646 = vld [vmem:[#allocation8 + $0x10] sm:$0xff]
        %v647 = vld [vmem:[#allocation8 + $0x18] sm:$0xff]
        %v648 = vld [vmem:[#allocation13] sm:$0x1]
        %v650 = vlaneseq
        %v651 = vshrl.u32 %v650, 7
        %v652 = vsub.s32 0, %v651
        %v653 = vrot.slane %v648, %v652
        %655 = vmatprep.subr.mxu0 0.0
        %656 = vmatpush1.msra.mxu0 %v644
        %657 = vmatprep.subr.mxu0 0.0
        %658 = vmatpush1.msra.mxu0 %v645
        %659 = vmatprep.subr.mxu0 0.0
        %660 = vmatpush1.msra.mxu0 %v646
        %661 = vmatprep.subr.mxu0 0.0
        %662 = vmatpush1.msra.mxu0 %v647
        %663 = vmatprep.subr.mxu0 0.0
        %664 = vmatpush1.msra.mxu0 0.0
        %665 = vmatprep.subr.mxu0 0.0
        %666 = vmatpush1.msra.mxu0 0.0
        %667 = vmatprep.subr.mxu0 0.0
        %668 = vmatpush1.msra.mxu0 0.0
        %669 = vmatprep.subr.mxu0 0.0
        %670 = vmatpush1.msra.mxu0 0.0
        %671 = vmatprep.subr.mxu0 0.0
        %672 = vmatpush1.msra.mxu0 0.0
        %673 = vmatprep.subr.mxu0 0.0
        %674 = vmatpush1.msra.mxu0 0.0
        %675 = vmatprep.subr.mxu0 0.0
        %676 = vmatpush1.msra.mxu0 0.0
        %677 = vmatprep.subr.mxu0 0.0
        %678 = vmatpush1.msra.mxu0 0.0
        %679 = vmatprep.subr.mxu0 0.0
        %680 = vmatpush1.msra.mxu0 0.0
        %681 = vmatprep.subr.mxu0 0.0
        %682 = vmatpush1.msra.mxu0 0.0
        %683 = vmatprep.subr.mxu0 0.0
        %684 = vmatpush1.msra.mxu0 0.0
        %685 = vmatprep.subr.mxu0 0.0
        %686 = vmatpush1.msra.mxu0 0.0
        %687 = vmatprep.subr.mxu0 0.0
        %688 = vmatpush1.msra.mxu0 0.0
        %689 = vmatprep.subr.mxu0 0.0
        %690 = vmatpush1.msra.mxu0 0.0
        %691 = vmatprep.subr.mxu0 0.0
        %692 = vmatpush1.msra.mxu0 0.0
        %693 = vmatprep.subr.mxu0 0.0
        %694 = vmatpush1.msra.mxu0 0.0
        %695 = vmatprep.subr.mxu0 0.0
        %696 = vmatpush1.msra.mxu0 0.0
        %697 = vmatprep.subr.mxu0 0.0
        %698 = vmatpush1.msra.mxu0 0.0
        %699 = vmatprep.subr.mxu0 0.0
        %700 = vmatpush1.msra.mxu0 0.0
        %701 = vmatprep.subr.mxu0 0.0
        %702 = vmatpush1.msra.mxu0 0.0
        %703 = vmatprep.subr.mxu0 0.0
        %704 = vmatpush1.msra.mxu0 0.0
        %705 = vmatprep.subr.mxu0 0.0
        %706 = vmatpush1.msra.mxu0 0.0
        %707 = vmatprep.subr.mxu0 0.0
        %708 = vmatpush1.msra.mxu0 0.0
        %709 = vmatprep.subr.mxu0 0.0
        %710 = vmatpush1.msra.mxu0 0.0
        %711 = vmatprep.subr.mxu0 0.0
        %712 = vmatpush1.msra.mxu0 0.0
        %713 = vmatprep.subr.mxu0 0.0
        %714 = vmatpush1.msra.mxu0 0.0
        %715 = vmatprep.subr.mxu0 0.0
        %716 = vmatpush1.msra.mxu0 0.0
        %717 = vmatprep.subr.mxu0 0.0
        %718 = vmatpush1.msra.mxu0 0.0
        %719 = vmatprep.mubr.f32.mxu0 0.0
        %720 = vmatmul.mubr.f32.gmra.mrb[0].mxu0 %v488
        %v721 = vpop.f32.mrb[0].mxu0
        %v722 = vadd.f32 %v653, %v721
        %v723 = vpop.f32.mrb[0].mxu0
        %724 = vdwg.mxu0
        %725 = vst.msk [vmem:[%s473] sm:$0xff] %vm560, %v722
        %s726 = scalar_lea.vmem [#allocation5], 32
        %v727 = vld [vmem:[%s726] sm:$0xff]
        %v728 = vld [vmem:[%s726 + $0x8] sm:$0xff]
        %v729 = vld [vmem:[%s726 + $0x10] sm:$0xff]
        %v730 = vld [vmem:[%s726 + $0x18] sm:$0xff]
        %s731 = scalar_lea.vmem [#allocation10], 1
        %v732 = vld [vmem:[%s731] sm:$0x1]
        %v734 = vlaneseq
        %v735 = vshrl.u32 %v734, 7
        %v736 = vsub.s32 0, %v735
        %v737 = vrot.slane %v732, %v736
        %739 = vmatprep.subr.mxu0 0.0
        %740 = vmatpush1.msra.mxu0 %v727
        %741 = vmatprep.subr.mxu0 0.0
        %742 = vmatpush1.msra.mxu0 %v728
        %743 = vmatprep.subr.mxu0 0.0
        %744 = vmatpush1.msra.mxu0 %v729
        %745 = vmatprep.subr.mxu0 0.0
        %746 = vmatpush1.msra.mxu0 %v730
        %747 = vmatprep.subr.mxu0 0.0
        %748 = vmatpush1.msra.mxu0 0.0
        %749 = vmatprep.subr.mxu0 0.0
        %750 = vmatpush1.msra.mxu0 0.0
        %751 = vmatprep.subr.mxu0 0.0
        %752 = vmatpush1.msra.mxu0 0.0
        %753 = vmatprep.subr.mxu0 0.0
        %754 = vmatpush1.msra.mxu0 0.0
        %755 = vmatprep.subr.mxu0 0.0
        %756 = vmatpush1.msra.mxu0 0.0
        %757 = vmatprep.subr.mxu0 0.0
        %758 = vmatpush1.msra.mxu0 0.0
        %759 = vmatprep.subr.mxu0 0.0
        %760 = vmatpush1.msra.mxu0 0.0
        %761 = vmatprep.subr.mxu0 0.0
        %762 = vmatpush1.msra.mxu0 0.0
        %763 = vmatprep.subr.mxu0 0.0
        %764 = vmatpush1.msra.mxu0 0.0
        %765 = vmatprep.subr.mxu0 0.0
        %766 = vmatpush1.msra.mxu0 0.0
        %767 = vmatprep.subr.mxu0 0.0
        %768 = vmatpush1.msra.mxu0 0.0
        %769 = vmatprep.subr.mxu0 0.0
        %770 = vmatpush1.msra.mxu0 0.0
        %771 = vmatprep.subr.mxu0 0.0
        %772 = vmatpush1.msra.mxu0 0.0
        %773 = vmatprep.subr.mxu0 0.0
        %774 = vmatpush1.msra.mxu0 0.0
        %775 = vmatprep.subr.mxu0 0.0
        %776 = vmatpush1.msra.mxu0 0.0
        %777 = vmatprep.subr.mxu0 0.0
        %778 = vmatpush1.msra.mxu0 0.0
        %779 = vmatprep.subr.mxu0 0.0
        %780 = vmatpush1.msra.mxu0 0.0
        %781 = vmatprep.subr.mxu0 0.0
        %782 = vmatpush1.msra.mxu0 0.0
        %783 = vmatprep.subr.mxu0 0.0
        %784 = vmatpush1.msra.mxu0 0.0
        %785 = vmatprep.subr.mxu0 0.0
        %786 = vmatpush1.msra.mxu0 0.0
        %787 = vmatprep.subr.mxu0 0.0
        %788 = vmatpush1.msra.mxu0 0.0
        %789 = vmatprep.subr.mxu0 0.0
        %790 = vmatpush1.msra.mxu0 0.0
        %791 = vmatprep.subr.mxu0 0.0
        %792 = vmatpush1.msra.mxu0 0.0
        %793 = vmatprep.subr.mxu0 0.0
        %794 = vmatpush1.msra.mxu0 0.0
        %795 = vmatprep.subr.mxu0 0.0
        %796 = vmatpush1.msra.mxu0 0.0
        %797 = vmatprep.subr.mxu0 0.0
        %798 = vmatpush1.msra.mxu0 0.0
        %799 = vmatprep.subr.mxu0 0.0
        %800 = vmatpush1.msra.mxu0 0.0
        %801 = vmatprep.subr.mxu0 0.0
        %802 = vmatpush1.msra.mxu0 0.0
        %803 = vmatprep.mubr.f32.mxu0 0.0
        %804 = vmatmul.mubr.f32.gmra.mrb[0].mxu0 %v488
        %v805 = vpop.f32.mrb[0].mxu0
        %v806 = vadd.f32 %v737, %v805
        %v807 = vpop.f32.mrb[0].mxu0
        %808 = vdwg.mxu0
        %s809 = scalar_lea.vmem %s459, 8 [#allocation14]
        %810 = vst.msk [vmem:[%s809] sm:$0xff] %vm560, %v806
        %s811 = scalar_lea.vmem [#allocation7], 32
        %v812 = vld [vmem:[%s811] sm:$0xff]
        %v813 = vld [vmem:[%s811 + $0x8] sm:$0xff]
        %v814 = vld [vmem:[%s811 + $0x10] sm:$0xff]
        %v815 = vld [vmem:[%s811 + $0x18] sm:$0xff]
        %s816 = scalar_lea.vmem [#allocation11], 1
        %v817 = vld [vmem:[%s816] sm:$0x1]
        %v819 = vlaneseq
        %v820 = vshrl.u32 %v819, 7
        %v821 = vsub.s32 0, %v820
        %v822 = vrot.slane %v817, %v821
        %824 = vmatprep.subr.mxu0 0.0
        %825 = vmatpush1.msra.mxu0 %v812
        %826 = vmatprep.subr.mxu0 0.0
        %827 = vmatpush1.msra.mxu0 %v813
        %828 = vmatprep.subr.mxu0 0.0
        %829 = vmatpush1.msra.mxu0 %v814
        %830 = vmatprep.subr.mxu0 0.0
        %831 = vmatpush1.msra.mxu0 %v815
        %832 = vmatprep.subr.mxu0 0.0
        %833 = vmatpush1.msra.mxu0 0.0
        %834 = vmatprep.subr.mxu0 0.0
        %835 = vmatpush1.msra.mxu0 0.0
        %836 = vmatprep.subr.mxu0 0.0
        %837 = vmatpush1.msra.mxu0 0.0
        %838 = vmatprep.subr.mxu0 0.0
        %839 = vmatpush1.msra.mxu0 0.0
        %840 = vmatprep.subr.mxu0 0.0
        %841 = vmatpush1.msra.mxu0 0.0
        %842 = vmatprep.subr.mxu0 0.0
        %843 = vmatpush1.msra.mxu0 0.0
        %844 = vmatprep.subr.mxu0 0.0
        %845 = vmatpush1.msra.mxu0 0.0
        %846 = vmatprep.subr.mxu0 0.0
        %847 = vmatpush1.msra.mxu0 0.0
        %848 = vmatprep.subr.mxu0 0.0
        %849 = vmatpush1.msra.mxu0 0.0
        %850 = vmatprep.subr.mxu0 0.0
        %851 = vmatpush1.msra.mxu0 0.0
        %852 = vmatprep.subr.mxu0 0.0
        %853 = vmatpush1.msra.mxu0 0.0
        %854 = vmatprep.subr.mxu0 0.0
        %855 = vmatpush1.msra.mxu0 0.0
        %856 = vmatprep.subr.mxu0 0.0
        %857 = vmatpush1.msra.mxu0 0.0
        %858 = vmatprep.subr.mxu0 0.0
        %859 = vmatpush1.msra.mxu0 0.0
        %860 = vmatprep.subr.mxu0 0.0
        %861 = vmatpush1.msra.mxu0 0.0
        %862 = vmatprep.subr.mxu0 0.0
        %863 = vmatpush1.msra.mxu0 0.0
        %864 = vmatprep.subr.mxu0 0.0
        %865 = vmatpush1.msra.mxu0 0.0
        %866 = vmatprep.subr.mxu0 0.0
        %867 = vmatpush1.msra.mxu0 0.0
        %868 = vmatprep.subr.mxu0 0.0
        %869 = vmatpush1.msra.mxu0 0.0
        %870 = vmatprep.subr.mxu0 0.0
        %871 = vmatpush1.msra.mxu0 0.0
        %872 = vmatprep.subr.mxu0 0.0
        %873 = vmatpush1.msra.mxu0 0.0
        %874 = vmatprep.subr.mxu0 0.0
        %875 = vmatpush1.msra.mxu0 0.0
        %876 = vmatprep.subr.mxu0 0.0
        %877 = vmatpush1.msra.mxu0 0.0
        %878 = vmatprep.subr.mxu0 0.0
        %879 = vmatpush1.msra.mxu0 0.0
        %880 = vmatprep.subr.mxu0 0.0
        %881 = vmatpush1.msra.mxu0 0.0
        %882 = vmatprep.subr.mxu0 0.0
        %883 = vmatpush1.msra.mxu0 0.0
        %884 = vmatprep.subr.mxu0 0.0
        %885 = vmatpush1.msra.mxu0 0.0
        %886 = vmatprep.subr.mxu0 0.0
        %887 = vmatpush1.msra.mxu0 0.0
        %888 = vmatprep.mubr.f32.mxu0 0.0
        %889 = vmatmul.mubr.f32.gmra.mrb[0].mxu0 %v488
        %v890 = vpop.f32.mrb[0].mxu0
        %v891 = vadd.f32 %v822, %v890
        %v892 = vpop.f32.mrb[0].mxu0
        %893 = vdwg.mxu0
        %s894 = scalar_lea.vmem %s466, 8 [#allocation15]
        %895 = vst.msk [vmem:[%s894] sm:$0xff] %vm560, %v891
        %s896 = scalar_lea.vmem [#allocation8], 32
        %v897 = vld [vmem:[%s896] sm:$0xff]
        %v898 = vld [vmem:[%s896 + $0x8] sm:$0xff]
        %v899 = vld [vmem:[%s896 + $0x10] sm:$0xff]
        %v900 = vld [vmem:[%s896 + $0x18] sm:$0xff]
        %s901 = scalar_lea.vmem [#allocation13], 1
        %v902 = vld [vmem:[%s901] sm:$0x1]
        %v904 = vlaneseq
        %v905 = vshrl.u32 %v904, 7
        %v906 = vsub.s32 0, %v905
        %v907 = vrot.slane %v902, %v906
        %909 = vmatprep.subr.mxu0 0.0
        %910 = vmatpush1.msra.mxu0 %v897
        %911 = vmatprep.subr.mxu0 0.0
        %912 = vmatpush1.msra.mxu0 %v898
        %913 = vmatprep.subr.mxu0 0.0
        %914 = vmatpush1.msra.mxu0 %v899
        %915 = vmatprep.subr.mxu0 0.0
        %916 = vmatpush1.msra.mxu0 %v900
        %917 = vmatprep.subr.mxu0 0.0
        %918 = vmatpush1.msra.mxu0 0.0
        %919 = vmatprep.subr.mxu0 0.0
        %920 = vmatpush1.msra.mxu0 0.0
        %921 = vmatprep.subr.mxu0 0.0
        %922 = vmatpush1.msra.mxu0 0.0
        %923 = vmatprep.subr.mxu0 0.0
        %924 = vmatpush1.msra.mxu0 0.0
        %925 = vmatprep.subr.mxu0 0.0
        %926 = vmatpush1.msra.mxu0 0.0
        %927 = vmatprep.subr.mxu0 0.0
        %928 = vmatpush1.msra.mxu0 0.0
        %929 = vmatprep.subr.mxu0 0.0
        %930 = vmatpush1.msra.mxu0 0.0
        %931 = vmatprep.subr.mxu0 0.0
        %932 = vmatpush1.msra.mxu0 0.0
        %933 = vmatprep.subr.mxu0 0.0
        %934 = vmatpush1.msra.mxu0 0.0
        %935 = vmatprep.subr.mxu0 0.0
        %936 = vmatpush1.msra.mxu0 0.0
        %937 = vmatprep.subr.mxu0 0.0
        %938 = vmatpush1.msra.mxu0 0.0
        %939 = vmatprep.subr.mxu0 0.0
        %940 = vmatpush1.msra.mxu0 0.0
        %941 = vmatprep.subr.mxu0 0.0
        %942 = vmatpush1.msra.mxu0 0.0
        %943 = vmatprep.subr.mxu0 0.0
        %944 = vmatpush1.msra.mxu0 0.0
        %945 = vmatprep.subr.mxu0 0.0
        %946 = vmatpush1.msra.mxu0 0.0
        %947 = vmatprep.subr.mxu0 0.0
        %948 = vmatpush1.msra.mxu0 0.0
        %949 = vmatprep.subr.mxu0 0.0
        %950 = vmatpush1.msra.mxu0 0.0
        %951 = vmatprep.subr.mxu0 0.0
        %952 = vmatpush1.msra.mxu0 0.0
        %953 = vmatprep.subr.mxu0 0.0
        %954 = vmatpush1.msra.mxu0 0.0
        %955 = vmatprep.subr.mxu0 0.0
        %956 = vmatpush1.msra.mxu0 0.0
        %957 = vmatprep.subr.mxu0 0.0
        %958 = vmatpush1.msra.mxu0 0.0
        %959 = vmatprep.subr.mxu0 0.0
        %960 = vmatpush1.msra.mxu0 0.0
        %961 = vmatprep.subr.mxu0 0.0
        %962 = vmatpush1.msra.mxu0 0.0
        %963 = vmatprep.subr.mxu0 0.0
        %964 = vmatpush1.msra.mxu0 0.0
        %965 = vmatprep.subr.mxu0 0.0
        %966 = vmatpush1.msra.mxu0 0.0
        %967 = vmatprep.subr.mxu0 0.0
        %968 = vmatpush1.msra.mxu0 0.0
        %969 = vmatprep.subr.mxu0 0.0
        %970 = vmatpush1.msra.mxu0 0.0
        %971 = vmatprep.subr.mxu0 0.0
        %972 = vmatpush1.msra.mxu0 0.0
        %973 = vmatprep.mubr.f32.mxu0 0.0
        %974 = vmatmul.mubr.f32.gmra.mrb[0].mxu0 %v488
        %v975 = vpop.f32.mrb[0].mxu0
        %v976 = vadd.f32 %v907, %v975
        %v977 = vpop.f32.mrb[0].mxu0
        %978 = vdwg.mxu0
        %s979 = scalar_lea.vmem %s473, 8 [#allocation17]
        %980 = vst.msk [vmem:[%s979] sm:$0xff] %vm560, %v976
        %s981 = scalar_lea.vmem [#allocation5], 64
        %v982 = vld [vmem:[%s981] sm:$0xff]
        %v983 = vld [vmem:[%s981 + $0x8] sm:$0xff]
        %v984 = vld [vmem:[%s981 + $0x10] sm:$0xff]
        %v985 = vld [vmem:[%s981 + $0x18] sm:$0xff]
        %s986 = scalar_lea.vmem [#allocation10], 2
        %v987 = vld [vmem:[%s986] sm:$0x1]
        %v989 = vlaneseq
        %v990 = vshrl.u32 %v989, 7
        %v991 = vsub.s32 0, %v990
        %v992 = vrot.slane %v987, %v991
        %994 = vmatprep.subr.mxu0 0.0
        %995 = vmatpush1.msra.mxu0 %v982
        %996 = vmatprep.subr.mxu0 0.0
        %997 = vmatpush1.msra.mxu0 %v983
        %998 = vmatprep.subr.mxu0 0.0
        %999 = vmatpush1.msra.mxu0 %v984
        %1000 = vmatprep.subr.mxu0 0.0
        %1001 = vmatpush1.msra.mxu0 %v985
        %1002 = vmatprep.subr.mxu0 0.0
        %1003 = vmatpush1.msra.mxu0 0.0
        %1004 = vmatprep.subr.mxu0 0.0
        %1005 = vmatpush1.msra.mxu0 0.0
        %1006 = vmatprep.subr.mxu0 0.0
        %1007 = vmatpush1.msra.mxu0 0.0
        %1008 = vmatprep.subr.mxu0 0.0
        %1009 = vmatpush1.msra.mxu0 0.0
        %1010 = vmatprep.subr.mxu0 0.0
        %1011 = vmatpush1.msra.mxu0 0.0
        %1012 = vmatprep.subr.mxu0 0.0
        %1013 = vmatpush1.msra.mxu0 0.0
        %1014 = vmatprep.subr.mxu0 0.0
        %1015 = vmatpush1.msra.mxu0 0.0
        %1016 = vmatprep.subr.mxu0 0.0
        %1017 = vmatpush1.msra.mxu0 0.0
        %1018 = vmatprep.subr.mxu0 0.0
        %1019 = vmatpush1.msra.mxu0 0.0
        %1020 = vmatprep.subr.mxu0 0.0
        %1021 = vmatpush1.msra.mxu0 0.0
        %1022 = vmatprep.subr.mxu0 0.0
        %1023 = vmatpush1.msra.mxu0 0.0
        %1024 = vmatprep.subr.mxu0 0.0
        %1025 = vmatpush1.msra.mxu0 0.0
        %1026 = vmatprep.subr.mxu0 0.0
        %1027 = vmatpush1.msra.mxu0 0.0
        %1028 = vmatprep.subr.mxu0 0.0
        %1029 = vmatpush1.msra.mxu0 0.0
        %1030 = vmatprep.subr.mxu0 0.0
        %1031 = vmatpush1.msra.mxu0 0.0
        %1032 = vmatprep.subr.mxu0 0.0
        %1033 = vmatpush1.msra.mxu0 0.0
        %1034 = vmatprep.subr.mxu0 0.0
        %1035 = vmatpush1.msra.mxu0 0.0
        %1036 = vmatprep.subr.mxu0 0.0
        %1037 = vmatpush1.msra.mxu0 0.0
        %1038 = vmatprep.subr.mxu0 0.0
        %1039 = vmatpush1.msra.mxu0 0.0
        %1040 = vmatprep.subr.mxu0 0.0
        %1041 = vmatpush1.msra.mxu0 0.0
        %1042 = vmatprep.subr.mxu0 0.0
        %1043 = vmatpush1.msra.mxu0 0.0
        %1044 = vmatprep.subr.mxu0 0.0
        %1045 = vmatpush1.msra.mxu0 0.0
        %1046 = vmatprep.subr.mxu0 0.0
        %1047 = vmatpush1.msra.mxu0 0.0
        %1048 = vmatprep.subr.mxu0 0.0
        %1049 = vmatpush1.msra.mxu0 0.0
        %1050 = vmatprep.subr.mxu0 0.0
        %1051 = vmatpush1.msra.mxu0 0.0
        %1052 = vmatprep.subr.mxu0 0.0
        %1053 = vmatpush1.msra.mxu0 0.0
        %1054 = vmatprep.subr.mxu0 0.0
        %1055 = vmatpush1.msra.mxu0 0.0
        %1056 = vmatprep.subr.mxu0 0.0
        %1057 = vmatpush1.msra.mxu0 0.0
        %1058 = vmatprep.mubr.f32.mxu0 0.0
        %1059 = vmatmul.mubr.f32.gmra.mrb[0].mxu0 %v488
        %v1060 = vpop.f32.mrb[0].mxu0
        %v1061 = vadd.f32 %v992, %v1060
        %v1062 = vpop.f32.mrb[0].mxu0
        %1063 = vdwg.mxu0
        %s1064 = scalar_lea.vmem %s459, 16 [#allocation14]
        %1065 = vst.msk [vmem:[%s1064] sm:$0xff] %vm560, %v1061
        %s1066 = scalar_lea.vmem [#allocation7], 64
        %v1067 = vld [vmem:[%s1066] sm:$0xff]
        %v1068 = vld [vmem:[%s1066 + $0x8] sm:$0xff]
        %v1069 = vld [vmem:[%s1066 + $0x10] sm:$0xff]
        %v1070 = vld [vmem:[%s1066 + $0x18] sm:$0xff]
        %s1071 = scalar_lea.vmem [#allocation11], 2
        %v1072 = vld [vmem:[%s1071] sm:$0x1]
        %v1074 = vlaneseq
        %v1075 = vshrl.u32 %v1074, 7
        %v1076 = vsub.s32 0, %v1075
        %v1077 = vrot.slane %v1072, %v1076
        %1079 = vmatprep.subr.mxu0 0.0
        %1080 = vmatpush1.msra.mxu0 %v1067
        %1081 = vmatprep.subr.mxu0 0.0
        %1082 = vmatpush1.msra.mxu0 %v1068
        %1083 = vmatprep.subr.mxu0 0.0
        %1084 = vmatpush1.msra.mxu0 %v1069
        %1085 = vmatprep.subr.mxu0 0.0
        %1086 = vmatpush1.msra.mxu0 %v1070
        %1087 = vmatprep.subr.mxu0 0.0
        %1088 = vmatpush1.msra.mxu0 0.0
        %1089 = vmatprep.subr.mxu0 0.0
        %1090 = vmatpush1.msra.mxu0 0.0
        %1091 = vmatprep.subr.mxu0 0.0
        %1092 = vmatpush1.msra.mxu0 0.0
        %1093 = vmatprep.subr.mxu0 0.0
        %1094 = vmatpush1.msra.mxu0 0.0
        %1095 = vmatprep.subr.mxu0 0.0
        %1096 = vmatpush1.msra.mxu0 0.0
        %1097 = vmatprep.subr.mxu0 0.0
        %1098 = vmatpush1.msra.mxu0 0.0
        %1099 = vmatprep.subr.mxu0 0.0
        %1100 = vmatpush1.msra.mxu0 0.0
        %1101 = vmatprep.subr.mxu0 0.0
        %1102 = vmatpush1.msra.mxu0 0.0
        %1103 = vmatprep.subr.mxu0 0.0
        %1104 = vmatpush1.msra.mxu0 0.0
        %1105 = vmatprep.subr.mxu0 0.0
        %1106 = vmatpush1.msra.mxu0 0.0
        %1107 = vmatprep.subr.mxu0 0.0
        %1108 = vmatpush1.msra.mxu0 0.0
        %1109 = vmatprep.subr.mxu0 0.0
        %1110 = vmatpush1.msra.mxu0 0.0
        %1111 = vmatprep.subr.mxu0 0.0
        %1112 = vmatpush1.msra.mxu0 0.0
        %1113 = vmatprep.subr.mxu0 0.0
        %1114 = vmatpush1.msra.mxu0 0.0
        %1115 = vmatprep.subr.mxu0 0.0
        %1116 = vmatpush1.msra.mxu0 0.0
        %1117 = vmatprep.subr.mxu0 0.0
        %1118 = vmatpush1.msra.mxu0 0.0
        %1119 = vmatprep.subr.mxu0 0.0
        %1120 = vmatpush1.msra.mxu0 0.0
        %1121 = vmatprep.subr.mxu0 0.0
        %1122 = vmatpush1.msra.mxu0 0.0
        %1123 = vmatprep.subr.mxu0 0.0
        %1124 = vmatpush1.msra.mxu0 0.0
        %1125 = vmatprep.subr.mxu0 0.0
        %1126 = vmatpush1.msra.mxu0 0.0
        %1127 = vmatprep.subr.mxu0 0.0
        %1128 = vmatpush1.msra.mxu0 0.0
        %1129 = vmatprep.subr.mxu0 0.0
        %1130 = vmatpush1.msra.mxu0 0.0
        %1131 = vmatprep.subr.mxu0 0.0
        %1132 = vmatpush1.msra.mxu0 0.0
        %1133 = vmatprep.subr.mxu0 0.0
        %1134 = vmatpush1.msra.mxu0 0.0
        %1135 = vmatprep.subr.mxu0 0.0
        %1136 = vmatpush1.msra.mxu0 0.0
        %1137 = vmatprep.subr.mxu0 0.0
        %1138 = vmatpush1.msra.mxu0 0.0
        %1139 = vmatprep.subr.mxu0 0.0
        %1140 = vmatpush1.msra.mxu0 0.0
        %1141 = vmatprep.subr.mxu0 0.0
        %1142 = vmatpush1.msra.mxu0 0.0
        %1143 = vmatprep.mubr.f32.mxu0 0.0
        %1144 = vmatmul.mubr.f32.gmra.mrb[0].mxu0 %v488
        %v1145 = vpop.f32.mrb[0].mxu0
        %v1146 = vadd.f32 %v1077, %v1145
        %v1147 = vpop.f32.mrb[0].mxu0
        %1148 = vdwg.mxu0
        %s1149 = scalar_lea.vmem %s466, 16 [#allocation15]
        %1150 = vst.msk [vmem:[%s1149] sm:$0xff] %vm560, %v1146
        %s1151 = scalar_lea.vmem [#allocation8], 64
        %v1152 = vld [vmem:[%s1151] sm:$0xff]
        %v1153 = vld [vmem:[%s1151 + $0x8] sm:$0xff]
        %v1154 = vld [vmem:[%s1151 + $0x10] sm:$0xff]
        %v1155 = vld [vmem:[%s1151 + $0x18] sm:$0xff]
        %s1156 = scalar_lea.vmem [#allocation13], 2
        %v1157 = vld [vmem:[%s1156] sm:$0x1]
        %v1159 = vlaneseq
        %v1160 = vshrl.u32 %v1159, 7
        %v1161 = vsub.s32 0, %v1160
        %v1162 = vrot.slane %v1157, %v1161
        %1164 = vmatprep.subr.mxu0 0.0
        %1165 = vmatpush1.msra.mxu0 %v1152
        %1166 = vmatprep.subr.mxu0 0.0
        %1167 = vmatpush1.msra.mxu0 %v1153
        %1168 = vmatprep.subr.mxu0 0.0
        %1169 = vmatpush1.msra.mxu0 %v1154
        %1170 = vmatprep.subr.mxu0 0.0
        %1171 = vmatpush1.msra.mxu0 %v1155
        %1172 = vmatprep.subr.mxu0 0.0
        %1173 = vmatpush1.msra.mxu0 0.0
        %1174 = vmatprep.subr.mxu0 0.0
        %1175 = vmatpush1.msra.mxu0 0.0
        %1176 = vmatprep.subr.mxu0 0.0
        %1177 = vmatpush1.msra.mxu0 0.0
        %1178 = vmatprep.subr.mxu0 0.0
        %1179 = vmatpush1.msra.mxu0 0.0
        %1180 = vmatprep.subr.mxu0 0.0
        %1181 = vmatpush1.msra.mxu0 0.0
        %1182 = vmatprep.subr.mxu0 0.0
        %1183 = vmatpush1.msra.mxu0 0.0
        %1184 = vmatprep.subr.mxu0 0.0
        %1185 = vmatpush1.msra.mxu0 0.0
        %1186 = vmatprep.subr.mxu0 0.0
        %1187 = vmatpush1.msra.mxu0 0.0
        %1188 = vmatprep.subr.mxu0 0.0
        %1189 = vmatpush1.msra.mxu0 0.0
        %1190 = vmatprep.subr.mxu0 0.0
        %1191 = vmatpush1.msra.mxu0 0.0
        %1192 = vmatprep.subr.mxu0 0.0
        %1193 = vmatpush1.msra.mxu0 0.0
        %1194 = vmatprep.subr.mxu0 0.0
        %1195 = vmatpush1.msra.mxu0 0.0
        %1196 = vmatprep.subr.mxu0 0.0
        %1197 = vmatpush1.msra.mxu0 0.0
        %1198 = vmatprep.subr.mxu0 0.0
        %1199 = vmatpush1.msra.mxu0 0.0
        %1200 = vmatprep.subr.mxu0 0.0
        %1201 = vmatpush1.msra.mxu0 0.0
        %1202 = vmatprep.subr.mxu0 0.0
        %1203 = vmatpush1.msra.mxu0 0.0
        %1204 = vmatprep.subr.mxu0 0.0
        %1205 = vmatpush1.msra.mxu0 0.0
        %1206 = vmatprep.subr.mxu0 0.0
        %1207 = vmatpush1.msra.mxu0 0.0
        %1208 = vmatprep.subr.mxu0 0.0
        %1209 = vmatpush1.msra.mxu0 0.0
        %1210 = vmatprep.subr.mxu0 0.0
        %1211 = vmatpush1.msra.mxu0 0.0
        %1212 = vmatprep.subr.mxu0 0.0
        %1213 = vmatpush1.msra.mxu0 0.0
        %1214 = vmatprep.subr.mxu0 0.0
        %1215 = vmatpush1.msra.mxu0 0.0
        %1216 = vmatprep.subr.mxu0 0.0
        %1217 = vmatpush1.msra.mxu0 0.0
        %1218 = vmatprep.subr.mxu0 0.0
        %1219 = vmatpush1.msra.mxu0 0.0
        %1220 = vmatprep.subr.mxu0 0.0
        %1221 = vmatpush1.msra.mxu0 0.0
        %1222 = vmatprep.subr.mxu0 0.0
        %1223 = vmatpush1.msra.mxu0 0.0
        %1224 = vmatprep.subr.mxu0 0.0
        %1225 = vmatpush1.msra.mxu0 0.0
        %1226 = vmatprep.subr.mxu0 0.0
        %1227 = vmatpush1.msra.mxu0 0.0
        %1228 = vmatprep.mubr.f32.mxu0 0.0
        %1229 = vmatmul.mubr.f32.gmra.mrb[0].mxu0 %v488
        %v1230 = vpop.f32.mrb[0].mxu0
        %v1231 = vadd.f32 %v1162, %v1230
        %v1232 = vpop.f32.mrb[0].mxu0
        %1233 = vdwg.mxu0
        %s1234 = scalar_lea.vmem %s473, 16 [#allocation17]
        %1235 = vst.msk [vmem:[%s1234] sm:$0xff] %vm560, %v1231
        %s1236 = scalar_lea.vmem [#allocation5], 96
        %v1237 = vld [vmem:[%s1236] sm:$0xff]
        %v1238 = vld [vmem:[%s1236 + $0x8] sm:$0xff]
        %v1239 = vld [vmem:[%s1236 + $0x10] sm:$0xff]
        %v1240 = vld [vmem:[%s1236 + $0x18] sm:$0xff]
        %s1241 = scalar_lea.vmem [#allocation10], 3
        %v1242 = vld [vmem:[%s1241] sm:$0x1]
        %v1244 = vlaneseq
        %v1245 = vshrl.u32 %v1244, 7
        %v1246 = vsub.s32 0, %v1245
        %v1247 = vrot.slane %v1242, %v1246
        %1249 = vmatprep.subr.mxu0 0.0
        %1250 = vmatpush1.msra.mxu0 %v1237
        %1251 = vmatprep.subr.mxu0 0.0
        %1252 = vmatpush1.msra.mxu0 %v1238
        %1253 = vmatprep.subr.mxu0 0.0
        %1254 = vmatpush1.msra.mxu0 %v1239
        %1255 = vmatprep.subr.mxu0 0.0
        %1256 = vmatpush1.msra.mxu0 %v1240
        %1257 = vmatprep.subr.mxu0 0.0
        %1258 = vmatpush1.msra.mxu0 0.0
        %1259 = vmatprep.subr.mxu0 0.0
        %1260 = vmatpush1.msra.mxu0 0.0
        %1261 = vmatprep.subr.mxu0 0.0
        %1262 = vmatpush1.msra.mxu0 0.0
        %1263 = vmatprep.subr.mxu0 0.0
        %1264 = vmatpush1.msra.mxu0 0.0
        %1265 = vmatprep.subr.mxu0 0.0
        %1266 = vmatpush1.msra.mxu0 0.0
        %1267 = vmatprep.subr.mxu0 0.0
        %1268 = vmatpush1.msra.mxu0 0.0
        %1269 = vmatprep.subr.mxu0 0.0
        %1270 = vmatpush1.msra.mxu0 0.0
        %1271 = vmatprep.subr.mxu0 0.0
        %1272 = vmatpush1.msra.mxu0 0.0
        %1273 = vmatprep.subr.mxu0 0.0
        %1274 = vmatpush1.msra.mxu0 0.0
        %1275 = vmatprep.subr.mxu0 0.0
        %1276 = vmatpush1.msra.mxu0 0.0
        %1277 = vmatprep.subr.mxu0 0.0
        %1278 = vmatpush1.msra.mxu0 0.0
        %1279 = vmatprep.subr.mxu0 0.0
        %1280 = vmatpush1.msra.mxu0 0.0
        %1281 = vmatprep.subr.mxu0 0.0
        %1282 = vmatpush1.msra.mxu0 0.0
        %1283 = vmatprep.subr.mxu0 0.0
        %1284 = vmatpush1.msra.mxu0 0.0
        %1285 = vmatprep.subr.mxu0 0.0
        %1286 = vmatpush1.msra.mxu0 0.0
        %1287 = vmatprep.subr.mxu0 0.0
        %1288 = vmatpush1.msra.mxu0 0.0
        %1289 = vmatprep.subr.mxu0 0.0
        %1290 = vmatpush1.msra.mxu0 0.0
        %1291 = vmatprep.subr.mxu0 0.0
        %1292 = vmatpush1.msra.mxu0 0.0
        %1293 = vmatprep.subr.mxu0 0.0
        %1294 = vmatpush1.msra.mxu0 0.0
        %1295 = vmatprep.subr.mxu0 0.0
        %1296 = vmatpush1.msra.mxu0 0.0
        %1297 = vmatprep.subr.mxu0 0.0
        %1298 = vmatpush1.msra.mxu0 0.0
        %1299 = vmatprep.subr.mxu0 0.0
        %1300 = vmatpush1.msra.mxu0 0.0
        %1301 = vmatprep.subr.mxu0 0.0
        %1302 = vmatpush1.msra.mxu0 0.0
        %1303 = vmatprep.subr.mxu0 0.0
        %1304 = vmatpush1.msra.mxu0 0.0
        %1305 = vmatprep.subr.mxu0 0.0
        %1306 = vmatpush1.msra.mxu0 0.0
        %1307 = vmatprep.subr.mxu0 0.0
        %1308 = vmatpush1.msra.mxu0 0.0
        %1309 = vmatprep.subr.mxu0 0.0
        %1310 = vmatpush1.msra.mxu0 0.0
        %1311 = vmatprep.subr.mxu0 0.0
        %1312 = vmatpush1.msra.mxu0 0.0
        %1313 = vmatprep.mubr.f32.mxu0 0.0
        %1314 = vmatmul.mubr.f32.gmra.mrb[0].mxu0 %v488
        %v1315 = vpop.f32.mrb[0].mxu0
        %v1316 = vadd.f32 %v1247, %v1315
        %v1317 = vpop.f32.mrb[0].mxu0
        %1318 = vdwg.mxu0
        %s1319 = scalar_lea.vmem %s459, 24 [#allocation14]
        %1320 = vst.msk [vmem:[%s1319] sm:$0xff] %vm560, %v1316
        %s1321 = scalar_lea.vmem [#allocation7], 96
        %v1322 = vld [vmem:[%s1321] sm:$0xff]
        %v1323 = vld [vmem:[%s1321 + $0x8] sm:$0xff]
        %v1324 = vld [vmem:[%s1321 + $0x10] sm:$0xff]
        %v1325 = vld [vmem:[%s1321 + $0x18] sm:$0xff]
        %s1326 = scalar_lea.vmem [#allocation11], 3
        %v1327 = vld [vmem:[%s1326] sm:$0x1]
        %v1329 = vlaneseq
        %v1330 = vshrl.u32 %v1329, 7
        %v1331 = vsub.s32 0, %v1330
        %v1332 = vrot.slane %v1327, %v1331
        %1334 = vmatprep.subr.mxu0 0.0
        %1335 = vmatpush1.msra.mxu0 %v1322
        %1336 = vmatprep.subr.mxu0 0.0
        %1337 = vmatpush1.msra.mxu0 %v1323
        %1338 = vmatprep.subr.mxu0 0.0
        %1339 = vmatpush1.msra.mxu0 %v1324
        %1340 = vmatprep.subr.mxu0 0.0
        %1341 = vmatpush1.msra.mxu0 %v1325
        %1342 = vmatprep.subr.mxu0 0.0
        %1343 = vmatpush1.msra.mxu0 0.0
        %1344 = vmatprep.subr.mxu0 0.0
        %1345 = vmatpush1.msra.mxu0 0.0
        %1346 = vmatprep.subr.mxu0 0.0
        %1347 = vmatpush1.msra.mxu0 0.0
        %1348 = vmatprep.subr.mxu0 0.0
        %1349 = vmatpush1.msra.mxu0 0.0
        %1350 = vmatprep.subr.mxu0 0.0
        %1351 = vmatpush1.msra.mxu0 0.0
        %1352 = vmatprep.subr.mxu0 0.0
        %1353 = vmatpush1.msra.mxu0 0.0
        %1354 = vmatprep.subr.mxu0 0.0
        %1355 = vmatpush1.msra.mxu0 0.0
        %1356 = vmatprep.subr.mxu0 0.0
        %1357 = vmatpush1.msra.mxu0 0.0
        %1358 = vmatprep.subr.mxu0 0.0
        %1359 = vmatpush1.msra.mxu0 0.0
        %1360 = vmatprep.subr.mxu0 0.0
        %1361 = vmatpush1.msra.mxu0 0.0
        %1362 = vmatprep.subr.mxu0 0.0
        %1363 = vmatpush1.msra.mxu0 0.0
        %1364 = vmatprep.subr.mxu0 0.0
        %1365 = vmatpush1.msra.mxu0 0.0
        %1366 = vmatprep.subr.mxu0 0.0
        %1367 = vmatpush1.msra.mxu0 0.0
        %1368 = vmatprep.subr.mxu0 0.0
        %1369 = vmatpush1.msra.mxu0 0.0
        %1370 = vmatprep.subr.mxu0 0.0
        %1371 = vmatpush1.msra.mxu0 0.0
        %1372 = vmatprep.subr.mxu0 0.0
        %1373 = vmatpush1.msra.mxu0 0.0
        %1374 = vmatprep.subr.mxu0 0.0
        %1375 = vmatpush1.msra.mxu0 0.0
        %1376 = vmatprep.subr.mxu0 0.0
        %1377 = vmatpush1.msra.mxu0 0.0
        %1378 = vmatprep.subr.mxu0 0.0
        %1379 = vmatpush1.msra.mxu0 0.0
        %1380 = vmatprep.subr.mxu0 0.0
        %1381 = vmatpush1.msra.mxu0 0.0
        %1382 = vmatprep.subr.mxu0 0.0
        %1383 = vmatpush1.msra.mxu0 0.0
        %1384 = vmatprep.subr.mxu0 0.0
        %1385 = vmatpush1.msra.mxu0 0.0
        %1386 = vmatprep.subr.mxu0 0.0
        %1387 = vmatpush1.msra.mxu0 0.0
        %1388 = vmatprep.subr.mxu0 0.0
        %1389 = vmatpush1.msra.mxu0 0.0
        %1390 = vmatprep.subr.mxu0 0.0
        %1391 = vmatpush1.msra.mxu0 0.0
        %1392 = vmatprep.subr.mxu0 0.0
        %1393 = vmatpush1.msra.mxu0 0.0
        %1394 = vmatprep.subr.mxu0 0.0
        %1395 = vmatpush1.msra.mxu0 0.0
        %1396 = vmatprep.subr.mxu0 0.0
        %1397 = vmatpush1.msra.mxu0 0.0
        %1398 = vmatprep.mubr.f32.mxu0 0.0
        %1399 = vmatmul.mubr.f32.gmra.mrb[0].mxu0 %v488
        %v1400 = vpop.f32.mrb[0].mxu0
        %v1401 = vadd.f32 %v1332, %v1400
        %v1402 = vpop.f32.mrb[0].mxu0
        %1403 = vdwg.mxu0
        %s1404 = scalar_lea.vmem %s466, 24 [#allocation15]
        %1405 = vst.msk [vmem:[%s1404] sm:$0xff] %vm560, %v1401
        %s1406 = scalar_lea.vmem [#allocation8], 96
        %v1407 = vld [vmem:[%s1406] sm:$0xff]
        %v1408 = vld [vmem:[%s1406 + $0x8] sm:$0xff]
        %v1409 = vld [vmem:[%s1406 + $0x10] sm:$0xff]
        %v1410 = vld [vmem:[%s1406 + $0x18] sm:$0xff]
        %s1411 = scalar_lea.vmem [#allocation13], 3
        %v1412 = vld [vmem:[%s1411] sm:$0x1]
        %v1414 = vlaneseq
        %v1415 = vshrl.u32 %v1414, 7
        %v1416 = vsub.s32 0, %v1415
        %v1417 = vrot.slane %v1412, %v1416
        %1419 = vmatprep.subr.mxu0 0.0
        %1420 = vmatpush1.msra.mxu0 %v1407
        %1421 = vmatprep.subr.mxu0 0.0
        %1422 = vmatpush1.msra.mxu0 %v1408
        %1423 = vmatprep.subr.mxu0 0.0
        %1424 = vmatpush1.msra.mxu0 %v1409
        %1425 = vmatprep.subr.mxu0 0.0
        %1426 = vmatpush1.msra.mxu0 %v1410
        %1427 = vmatprep.subr.mxu0 0.0
        %1428 = vmatpush1.msra.mxu0 0.0
        %1429 = vmatprep.subr.mxu0 0.0
        %1430 = vmatpush1.msra.mxu0 0.0
        %1431 = vmatprep.subr.mxu0 0.0
        %1432 = vmatpush1.msra.mxu0 0.0
        %1433 = vmatprep.subr.mxu0 0.0
        %1434 = vmatpush1.msra.mxu0 0.0
        %1435 = vmatprep.subr.mxu0 0.0
        %1436 = vmatpush1.msra.mxu0 0.0
        %1437 = vmatprep.subr.mxu0 0.0
        %1438 = vmatpush1.msra.mxu0 0.0
        %1439 = vmatprep.subr.mxu0 0.0
        %1440 = vmatpush1.msra.mxu0 0.0
        %1441 = vmatprep.subr.mxu0 0.0
        %1442 = vmatpush1.msra.mxu0 0.0
        %1443 = vmatprep.subr.mxu0 0.0
        %1444 = vmatpush1.msra.mxu0 0.0
        %1445 = vmatprep.subr.mxu0 0.0
        %1446 = vmatpush1.msra.mxu0 0.0
        %1447 = vmatprep.subr.mxu0 0.0
        %1448 = vmatpush1.msra.mxu0 0.0
        %1449 = vmatprep.subr.mxu0 0.0
        %1450 = vmatpush1.msra.mxu0 0.0
        %1451 = vmatprep.subr.mxu0 0.0
        %1452 = vmatpush1.msra.mxu0 0.0
        %1453 = vmatprep.subr.mxu0 0.0
        %1454 = vmatpush1.msra.mxu0 0.0
        %1455 = vmatprep.subr.mxu0 0.0
        %1456 = vmatpush1.msra.mxu0 0.0
        %1457 = vmatprep.subr.mxu0 0.0
        %1458 = vmatpush1.msra.mxu0 0.0
        %1459 = vmatprep.subr.mxu0 0.0
        %1460 = vmatpush1.msra.mxu0 0.0
        %1461 = vmatprep.subr.mxu0 0.0
        %1462 = vmatpush1.msra.mxu0 0.0
        %1463 = vmatprep.subr.mxu0 0.0
        %1464 = vmatpush1.msra.mxu0 0.0
        %1465 = vmatprep.subr.mxu0 0.0
        %1466 = vmatpush1.msra.mxu0 0.0
        %1467 = vmatprep.subr.mxu0 0.0
        %1468 = vmatpush1.msra.mxu0 0.0
        %1469 = vmatprep.subr.mxu0 0.0
        %1470 = vmatpush1.msra.mxu0 0.0
        %1471 = vmatprep.subr.mxu0 0.0
        %1472 = vmatpush1.msra.mxu0 0.0
        %1473 = vmatprep.subr.mxu0 0.0
        %1474 = vmatpush1.msra.mxu0 0.0
        %1475 = vmatprep.subr.mxu0 0.0
        %1476 = vmatpush1.msra.mxu0 0.0
        %1477 = vmatprep.subr.mxu0 0.0
        %1478 = vmatpush1.msra.mxu0 0.0
        %1479 = vmatprep.subr.mxu0 0.0
        %1480 = vmatpush1.msra.mxu0 0.0
        %1481 = vmatprep.subr.mxu0 0.0
        %1482 = vmatpush1.msra.mxu0 0.0
        %1483 = vmatprep.mubr.f32.mxu0 0.0
        %1484 = vmatmul.mubr.f32.gmra.mrb[0].mxu0 %v488
        %v1485 = vpop.f32.mrb[0].mxu0
        %v1486 = vadd.f32 %v1417, %v1485
        %v1487 = vpop.f32.mrb[0].mxu0
        %1488 = vdwg.mxu0
        %s1489 = scalar_lea.vmem %s473, 24 [#allocation17]
        %1490 = vst.msk [vmem:[%s1489] sm:$0xff] %vm560, %v1486
        %s1491 = sand.u32 %s209, 1
        %s1492 = scalar_lea.sflag [#allocation4], %s1491
        %s1493 = sand.u32 %s209, 1
        %s1494 = smul.addr %s1493, 32
        %s1495 = scalar_lea.vmem [#allocation14], %s1494
        %s1496 = sand.u32 %s33, 1
        %s1497 = scalar_lea.sflag [#allocation16], %s1496
        %s1498 = sand.u32 %s237, 1
        %s1499 = smul.addr %s1498, 32
        %s1500 = scalar_lea.vmem [#allocation15], %s1499
        %s1501 = sand.u32 %s33, 1
        %s1502 = scalar_lea.sflag [#allocation16], %s1501
        %s1503 = sand.u32 %s265, 1
        %s1504 = smul.addr %s1503, 32
        %s1505 = scalar_lea.vmem [#allocation17], %s1504
        // Predicated region
        $region77: #{tpu_custom_call.1} parent=47 // pred_check
          %p1506 = pneg %p219
        $region78: #{tpu_custom_call.1} parent=47 // pred_check_branch
          %1508 = sbr.rel (%p1506) target = $region80
        $region79: #{tpu_custom_call.1} parent=47 // pred_region
          %s1510 = ssub.s32 512, 512
          %1511 = vsyncadd %s1492, %s1510
          %s1512 = smul.addr %s37, 4
          %s1513 = sadd.s32 %s38, %s1512
          %s1514 = smul.addr %s1513, 128
          %s1515 = scalar_lea.hbm %s7, %s1514
          %s1516 = sshll.u32 %s1495, 4
          %s1517 = int_to_ptr.vmem [resolvable:$true] %s1516
          %1522 = dma.vmem_to_hbm [thread:$0]  %s1517, 512, %s1515, %s1492, 128, 128, 8
        $region80: #{tpu_custom_call.1} parent=47 // pred_fallthru
          _
        // Predicated region
        $region81: #{tpu_custom_call.1} parent=47 // pred_check
          %p1523 = pneg %p247
        $region82: #{tpu_custom_call.1} parent=47 // pred_check_branch
          %1525 = sbr.rel (%p1523) target = $region84
        $region83: #{tpu_custom_call.1} parent=47 // pred_region
          %s1527 = ssub.s32 512, 512
          %1528 = vsyncadd %s1497, %s1527
          %s1529 = smul.addr %s37, 4
          %s1530 = sadd.s32 %s38, %s1529
          %s1531 = smul.addr %s1530, 128
          %s1532 = scalar_lea.hbm %s8, %s1531
          %s1533 = sshll.u32 %s1500, 4
          %s1534 = int_to_ptr.vmem [resolvable:$true] %s1533
          %1539 = dma.vmem_to_hbm [thread:$0]  %s1534, 512, %s1532, %s1497, 128, 128, 8
        $region84: #{tpu_custom_call.1} parent=47 // pred_fallthru
          _
        // Predicated region
        $region85: #{tpu_custom_call.1} parent=47 // pred_check
          %p1540 = pneg %p275
        $region86: #{tpu_custom_call.1} parent=47 // pred_check_branch
          %1542 = sbr.rel (%p1540) target = $region88
        $region87: #{tpu_custom_call.1} parent=47 // pred_region
          %s1544 = ssub.s32 512, 512
          %1545 = vsyncadd %s1502, %s1544
          %s1546 = smul.addr %s37, 4
          %s1547 = sadd.s32 %s38, %s1546
          %s1548 = smul.addr %s1547, 128
          %s1549 = scalar_lea.hbm %s9, %s1548
          %s1550 = sshll.u32 %s1505, 4
          %s1551 = int_to_ptr.vmem [resolvable:$true] %s1550
          %1556 = dma.vmem_to_hbm [thread:$0]  %s1551, 512, %s1549, %s1502, 128, 128, 8
        $region88: #{tpu_custom_call.1} parent=47 // pred_fallthru
          _
      $region48: #{tpu_custom_call.1} parent=5 // pred_fallthru
        _
      %p1557 = scmp.le.s32.totalorder 2, %s28
      // Predicated region
      $region89: #{tpu_custom_call.1} parent=5 // pred_check
        %p1558 = pneg %p1557
      $region90: #{tpu_custom_call.1} parent=5 // pred_check_branch
        %1560 = sbr.rel (%p1558) target = $region92
      $region91: #{tpu_custom_call.1} parent=5 // pred_region
        %s1561 = ssub.s32 %s28, 2
        // Predicated region
        $region93: #{tpu_custom_call.1} parent=91 // pred_check
          %p1562 = pneg %p225
        $region94: #{tpu_custom_call.1} parent=91 // pred_check_branch
          %1564 = sbr.rel (%p1562) target = $region96
        $region95: #{tpu_custom_call.1} parent=91 // pred_region
          %s1565 = sand.u32 %s210, 1
          %s1566 = scalar_lea.sflag [#allocation4], %s1565
          %s1567 = sand.u32 %s210, 1
          %s1568 = smul.addr %s1567, 32
          %s1569 = scalar_lea.vmem [#allocation14], %s1568
          %1570 = dma.done %s1566, 512
        $region96: #{tpu_custom_call.1} parent=91 // pred_fallthru
          _
        // Predicated region
        $region97: #{tpu_custom_call.1} parent=91 // pred_check
          %p1571 = pneg %p253
        $region98: #{tpu_custom_call.1} parent=91 // pred_check_branch
          %1573 = sbr.rel (%p1571) target = $region100
        $region99: #{tpu_custom_call.1} parent=91 // pred_region
          %s1574 = sand.u32 %s34, 1
          %s1575 = scalar_lea.sflag [#allocation16], %s1574
          %s1576 = sand.u32 %s238, 1
          %s1577 = smul.addr %s1576, 32
          %s1578 = scalar_lea.vmem [#allocation15], %s1577
          %1579 = dma.done %s1575, 512
        $region100: #{tpu_custom_call.1} parent=91 // pred_fallthru
          _
        // Predicated region
        $region101: #{tpu_custom_call.1} parent=91 // pred_check
          %p1580 = pneg %p281
        $region102: #{tpu_custom_call.1} parent=91 // pred_check_branch
          %1582 = sbr.rel (%p1580) target = $region104
        $region103: #{tpu_custom_call.1} parent=91 // pred_region
          %s1583 = sand.u32 %s34, 1
          %s1584 = scalar_lea.sflag [#allocation16], %s1583
          %s1585 = sand.u32 %s266, 1
          %s1586 = smul.addr %s1585, 32
          %s1587 = scalar_lea.vmem [#allocation17], %s1586
          %1588 = dma.done %s1584, 512
        $region104: #{tpu_custom_call.1} parent=91 // pred_fallthru
          _
      $region92: #{tpu_custom_call.1} parent=5 // pred_fallthru
        _
    $region6: #{tpu_custom_call.1} parent=1 // loop_footer
      %s32 = sadd.s32 1, %s28
    $region7: #{tpu_custom_call.1} parent=1 // loop_footer_branch
      %27 = sbr.rel target = $region3
    $region8: #{tpu_custom_call.1} parent=1 // loop_exit
      _
    %1589 = vsyncpa [#allocation3], 1
    %s1590 = scalar_lea.sflag [#allocation3], 1
    %1591 = vsyncpa %s1590, 1
    %1592 = vsyncpa [#allocation6], 1
    %1593 = vsyncpa [#allocation9], 1
    %1594 = vsyncpa [#allocation12], 1
    %1595 = vsyncpa [#allocation4], 1
    %s1596 = scalar_lea.sflag [#allocation4], 1
    %1597 = vsyncpa %s1596, 1
    %1598 = vsyncpa [#allocation16], 1
    %s1599 = scalar_lea.sflag [#allocation16], 1
    %1600 = vsyncpa %s1599, 1

</llo_original>
